<compile_context>
chip_gen: v6e
topology: v6e:2x2x1
jax: 0.10.0
libtpu: 0.0.40
codegen_flags: <defaults>
</compile_context>

<pallas_src>
import jax
import jax.numpy as jnp
import numpy as np
from jax.experimental import pallas as pl
from jax.experimental.pallas import tpu as pltpu


def _make_kernel(N, C, H, W, Hp, Wp, Ho, Wo, Ph, Pw, K, DIL, CPAD):

    def kernel(w_ref, b_ref, x_ref, o_ref, xpad_ref):
        # ---- zero-pad the input inside the kernel (VMEM scratch), avoiding a
        #      host-side jnp.pad and its extra HBM round-trip -----------------
        xpad_ref[...] = jnp.zeros((N, C, Hp, Wp), jnp.float32)
        for n in range(N):
            for c in range(C):
                xpad_ref[n, c, CPAD:CPAD + H, CPAD:CPAD + W] = x_ref[n, c]

        # ---- dilated 3x3 conv (C -> 1 channel), whole batch at once ---------
        # acc[n,oh,ow] = b + sum_{c,kh,kw} w[c,kh,kw] * xpad[n,c,oh+2kh,ow+2kw]
        acc = jnp.zeros((N, Ho, Wo), jnp.float32) + b_ref[0]
        for c in range(C):
            for kh in range(K):
                # hoist the (c, kh) row block; only the kw lane offset varies
                rows = xpad_ref[:, c, kh * DIL:kh * DIL + Ho, :]      # (N, Ho, Wp)
                for kw in range(K):
                    wv = w_ref[c * K * K + kh * K + kw]               # SMEM scalar
                    acc = acc + rows[:, :, kw * DIL:kw * DIL + Wo] * wv

        # ---- MaxPool2d(3, stride=2, padding=1), entirely in vregs ----------
        # stride-1 3x3 window max with edge duplication (equivalent to PyTorch's
        # -inf padding here: the pad value can never win the max), so there is
        # no scratch round-trip and no -inf * 0 = NaN hazard in the matmuls.
        up    = jnp.concatenate([acc[:, :1, :],  acc[:, :Ho - 1, :]], axis=1)
        down  = jnp.concatenate([acc[:, 1:, :],  acc[:, Ho - 1:, :]], axis=1)
        rmax  = jnp.maximum(jnp.maximum(acc, up), down)               # (N, Ho, Wo)
        left  = jnp.concatenate([rmax[:, :, :1], rmax[:, :, :Wo - 1]], axis=2)
        right = jnp.concatenate([rmax[:, :, 1:], rmax[:, :, Wo - 1:]], axis=2)
        wm    = jnp.maximum(jnp.maximum(rmax, left), right)           # (N, Ho, Wo)

        # stride-2 subsample expressed as 0/1 selection matmuls (built once per
        # call since the kernel is single-step):  pooled_n = S_r @ wm_n @ S_c.
        ri = jax.lax.broadcasted_iota(jnp.int32, (Ph, Ho), 0)
        rk = jax.lax.broadcasted_iota(jnp.int32, (Ph, Ho), 1)
        S_r = (rk == 2 * ri).astype(jnp.float32)                      # (Ph, Ho)
        ck = jax.lax.broadcasted_iota(jnp.int32, (Wo, Pw), 0)
        cj = jax.lax.broadcasted_iota(jnp.int32, (Wo, Pw), 1)
        S_c = (ck == 2 * cj).astype(jnp.float32)                      # (Wo, Pw)

        for n in range(N):            # N is small & static; plain 2-D MXU dots
            pooled = jnp.dot(
                jnp.dot(S_r, wm[n], preferred_element_type=jnp.float32),
                S_c, preferred_element_type=jnp.float32)              # (Ph, Pw)
            # ---- ReLU6 -------------------------------------------------------
            o_ref[n] = jnp.clip(pooled, 0.0, 6.0).astype(o_ref.dtype)

    return kernel


def model_forward(x, conv_w, conv_b):
    """x: (N, 3, H, W) f32, conv_w: (1, 3, 3, 3), conv_b: (1,) -> (N, 1, Ph, Pw)."""
    N, C, H, W = x.shape
    K, DIL, CPAD = 3, 2, 3
    Hp, Wp = H + 2 * CPAD, W + 2 * CPAD
    eff = DIL * (K - 1) + 1                       # effective kernel extent = 5
    Ho, Wo = Hp - eff + 1, Wp - eff + 1           # conv output = H + 2
    Ph = (Ho + 2 * 1 - K) // 2 + 1                # maxpool output
    Pw = (Wo + 2 * 1 - K) // 2 + 1

    w_flat = conv_w.reshape(-1).astype(jnp.float32)   # (27,) scalars in SMEM
    b = conv_b.astype(jnp.float32)                    # (1,)  scalar  in SMEM

    kernel = _make_kernel(N, C, H, W, Hp, Wp, Ho, Wo, Ph, Pw, K, DIL, CPAD)

    out = pl.pallas_call(                        # single invocation, no grid:
        kernel,                                  # whole batch processed at once
        out_shape=jax.ShapeDtypeStruct((N, Ph, Pw), jnp.float32),
        in_specs=[
            pl.BlockSpec(memory_space=pltpu.MemorySpace.SMEM),   # conv weights
            pl.BlockSpec(memory_space=pltpu.MemorySpace.SMEM),   # conv bias
            pl.BlockSpec(memory_space=pltpu.MemorySpace.VMEM),   # x (full batch)
        ],
        out_specs=pl.BlockSpec(memory_space=pltpu.MemorySpace.VMEM),
        scratch_shapes=[pltpu.VMEM((N, C, Hp, Wp), jnp.float32)],  # padded input
    )(w_flat, b, x.astype(jnp.float32))

    return out[:, None, :, :]     # (N, 1, Ph, Pw), matching PyTorch NCHW output


def _reference(x, conv_w, conv_b):
    """Pure-JAX reference (conv -> maxpool -> relu6) for correctness check."""
    y = jax.lax.conv_general_dilated(
        x, conv_w, window_strides=(1, 1), padding=((3, 3), (3, 3)),
        rhs_dilation=(2, 2), dimension_numbers=("NCHW", "OIHW", "NCHW"))
    y = y + conv_b.reshape(1, -1, 1, 1)
    y = jax.lax.reduce_window(
        y, -jnp.inf, jax.lax.max,
        window_dimensions=(1, 1, 3, 3), window_strides=(1, 1, 2, 2),
        padding=((0, 0), (0, 0), (1, 1), (1, 1)))
    return jnp.clip(y, 0.0, 6.0)


if __name__ == "__main__":
    key = jax.random.PRNGKey(0)
    kx, kw, kb = jax.random.split(key, 3)

    # Small shapes consistent with the module (batch=2, channels=3, spatial=16)
    x = jax.random.normal(kx, (2, 3, 16, 16), dtype=jnp.float32)

    # Deterministic Conv2d(3, 1, 3) params (PyTorch-style uniform(+-1/sqrt(fan_in)))
    fan_in = 3 * 3 * 3
    bound = 1.0 / np.sqrt(fan_in)
    conv_w = jax.random.uniform(kw, (1, 3, 3, 3), jnp.float32, -bound, bound)
    conv_b = jax.random.uniform(kb, (1,), jnp.float32, -bound, bound)

    out = model_forward(x, conv_w, conv_b)
    out = jax.block_until_ready(out)

    ref = _reference(x, conv_w, conv_b)
    assert out.shape == ref.shape == (2, 1, 9, 9), (out.shape, ref.shape)
    np.testing.assert_allclose(np.asarray(out), np.asarray(ref),
                               rtol=1e-5, atol=1e-5)
    print("KERNEL_OK")
</pallas_src>

<mosaic_0001>
module attributes {stable_mosaic.version = 11 : i64} {
  func.func @kernel(%arg0: memref<27xf32, #tpu.memory_space<smem>>, %arg1: memref<1xf32, #tpu.memory_space<smem>>, %arg2: memref<2x3x16x16xf32, #tpu.memory_space<vmem>>, %arg3: memref<2x9x9xf32, #tpu.memory_space<vmem>>, %arg4: memref<2x3x22x22xf32, #tpu.memory_space<vmem>>) attributes {dimension_semantics = [], scalar_prefetch = 0 : i64, scratch_operands = 1 : i64, tpu.core_type = #tpu.core_type<tc>} {
    %cst = arith.constant 0.000000e+00 : f32
    %0 = vector.broadcast %cst : f32 to vector<2x3x22x22xf32>
    %c0 = arith.constant 0 : index
    %c0_0 = arith.constant 0 : index
    %c0_1 = arith.constant 0 : index
    %c0_2 = arith.constant 0 : index
    %1 = vector.load %arg4[%c0, %c0_0, %c0_1, %c0_2] : memref<2x3x22x22xf32, #tpu.memory_space<vmem>>, vector<2x3x22x22xf32>
    tpu.vector_store %arg4[%c0, %c0_0, %c0_1, %c0_2], %0 {strides = array<i32>} : memref<2x3x22x22xf32, #tpu.memory_space<vmem>>, vector<2x3x22x22xf32>,
    %c0_3 = arith.constant 0 : index
    %c0_4 = arith.constant 0 : index
    %c0_5 = arith.constant 0 : index
    %c0_6 = arith.constant 0 : index
    %2 = vector.load %arg2[%c0_3, %c0_4, %c0_5, %c0_6] : memref<2x3x16x16xf32, #tpu.memory_space<vmem>>, vector<1x1x16x16xf32>
    %3 = vector.shape_cast %2 : vector<1x1x16x16xf32> to vector<16x16xf32>
    %c0_7 = arith.constant 0 : index
    %c0_8 = arith.constant 0 : index
    %c3 = arith.constant 3 : index
    %c3_9 = arith.constant 3 : index
    %4 = vector.load %arg4[%c0_7, %c0_8, %c3, %c3_9] : memref<2x3x22x22xf32, #tpu.memory_space<vmem>>, vector<1x1x16x16xf32>
    %5 = vector.shape_cast %4 : vector<1x1x16x16xf32> to vector<16x16xf32>
    %6 = vector.shape_cast %3 : vector<16x16xf32> to vector<1x1x16x16xf32>
    tpu.vector_store %arg4[%c0_7, %c0_8, %c3, %c3_9], %6 {strides = array<i32>} : memref<2x3x22x22xf32, #tpu.memory_space<vmem>>, vector<1x1x16x16xf32>,
    %c0_10 = arith.constant 0 : index
    %c1 = arith.constant 1 : index
    %c0_11 = arith.constant 0 : index
    %c0_12 = arith.constant 0 : index
    %7 = vector.load %arg2[%c0_10, %c1, %c0_11, %c0_12] : memref<2x3x16x16xf32, #tpu.memory_space<vmem>>, vector<1x1x16x16xf32>
    %8 = vector.shape_cast %7 : vector<1x1x16x16xf32> to vector<16x16xf32>
    %c0_13 = arith.constant 0 : index
    %c1_14 = arith.constant 1 : index
    %c3_15 = arith.constant 3 : index
    %c3_16 = arith.constant 3 : index
    %9 = vector.load %arg4[%c0_13, %c1_14, %c3_15, %c3_16] : memref<2x3x22x22xf32, #tpu.memory_space<vmem>>, vector<1x1x16x16xf32>
    %10 = vector.shape_cast %9 : vector<1x1x16x16xf32> to vector<16x16xf32>
    %11 = vector.shape_cast %8 : vector<16x16xf32> to vector<1x1x16x16xf32>
    tpu.vector_store %arg4[%c0_13, %c1_14, %c3_15, %c3_16], %11 {strides = array<i32>} : memref<2x3x22x22xf32, #tpu.memory_space<vmem>>, vector<1x1x16x16xf32>,
    %c0_17 = arith.constant 0 : index
    %c2 = arith.constant 2 : index
    %c0_18 = arith.constant 0 : index
    %c0_19 = arith.constant 0 : index
    %12 = vector.load %arg2[%c0_17, %c2, %c0_18, %c0_19] : memref<2x3x16x16xf32, #tpu.memory_space<vmem>>, vector<1x1x16x16xf32>
    %13 = vector.shape_cast %12 : vector<1x1x16x16xf32> to vector<16x16xf32>
    %c0_20 = arith.constant 0 : index
    %c2_21 = arith.constant 2 : index
    %c3_22 = arith.constant 3 : index
    %c3_23 = arith.constant 3 : index
    %14 = vector.load %arg4[%c0_20, %c2_21, %c3_22, %c3_23] : memref<2x3x22x22xf32, #tpu.memory_space<vmem>>, vector<1x1x16x16xf32>
    %15 = vector.shape_cast %14 : vector<1x1x16x16xf32> to vector<16x16xf32>
    %16 = vector.shape_cast %13 : vector<16x16xf32> to vector<1x1x16x16xf32>
    tpu.vector_store %arg4[%c0_20, %c2_21, %c3_22, %c3_23], %16 {strides = array<i32>} : memref<2x3x22x22xf32, #tpu.memory_space<vmem>>, vector<1x1x16x16xf32>,
    %c1_24 = arith.constant 1 : index
    %c0_25 = arith.constant 0 : index
    %c0_26 = arith.constant 0 : index
    %c0_27 = arith.constant 0 : index
    %17 = vector.load %arg2[%c1_24, %c0_25, %c0_26, %c0_27] : memref<2x3x16x16xf32, #tpu.memory_space<vmem>>, vector<1x1x16x16xf32>
    %18 = vector.shape_cast %17 : vector<1x1x16x16xf32> to vector<16x16xf32>
    %c1_28 = arith.constant 1 : index
    %c0_29 = arith.constant 0 : index
    %c3_30 = arith.constant 3 : index
    %c3_31 = arith.constant 3 : index
    %19 = vector.load %arg4[%c1_28, %c0_29, %c3_30, %c3_31] : memref<2x3x22x22xf32, #tpu.memory_space<vmem>>, vector<1x1x16x16xf32>
    %20 = vector.shape_cast %19 : vector<1x1x16x16xf32> to vector<16x16xf32>
    %21 = vector.shape_cast %18 : vector<16x16xf32> to vector<1x1x16x16xf32>
    tpu.vector_store %arg4[%c1_28, %c0_29, %c3_30, %c3_31], %21 {strides = array<i32>} : memref<2x3x22x22xf32, #tpu.memory_space<vmem>>, vector<1x1x16x16xf32>,
    %c1_32 = arith.constant 1 : index
    %c1_33 = arith.constant 1 : index
    %c0_34 = arith.constant 0 : index
    %c0_35 = arith.constant 0 : index
    %22 = vector.load %arg2[%c1_32, %c1_33, %c0_34, %c0_35] : memref<2x3x16x16xf32, #tpu.memory_space<vmem>>, vector<1x1x16x16xf32>
    %23 = vector.shape_cast %22 : vector<1x1x16x16xf32> to vector<16x16xf32>
    %c1_36 = arith.constant 1 : index
    %c1_37 = arith.constant 1 : index
    %c3_38 = arith.constant 3 : index
    %c3_39 = arith.constant 3 : index
    %24 = vector.load %arg4[%c1_36, %c1_37, %c3_38, %c3_39] : memref<2x3x22x22xf32, #tpu.memory_space<vmem>>, vector<1x1x16x16xf32>
    %25 = vector.shape_cast %24 : vector<1x1x16x16xf32> to vector<16x16xf32>
    %26 = vector.shape_cast %23 : vector<16x16xf32> to vector<1x1x16x16xf32>
    tpu.vector_store %arg4[%c1_36, %c1_37, %c3_38, %c3_39], %26 {strides = array<i32>} : memref<2x3x22x22xf32, #tpu.memory_space<vmem>>, vector<1x1x16x16xf32>,
    %c1_40 = arith.constant 1 : index
    %c2_41 = arith.constant 2 : index
    %c0_42 = arith.constant 0 : index
    %c0_43 = arith.constant 0 : index
    %27 = vector.load %arg2[%c1_40, %c2_41, %c0_42, %c0_43] : memref<2x3x16x16xf32, #tpu.memory_space<vmem>>, vector<1x1x16x16xf32>
    %28 = vector.shape_cast %27 : vector<1x1x16x16xf32> to vector<16x16xf32>
    %c1_44 = arith.constant 1 : index
    %c2_45 = arith.constant 2 : index
    %c3_46 = arith.constant 3 : index
    %c3_47 = arith.constant 3 : index
    %29 = vector.load %arg4[%c1_44, %c2_45, %c3_46, %c3_47] : memref<2x3x22x22xf32, #tpu.memory_space<vmem>>, vector<1x1x16x16xf32>
    %30 = vector.shape_cast %29 : vector<1x1x16x16xf32> to vector<16x16xf32>
    %31 = vector.shape_cast %28 : vector<16x16xf32> to vector<1x1x16x16xf32>
    tpu.vector_store %arg4[%c1_44, %c2_45, %c3_46, %c3_47], %31 {strides = array<i32>} : memref<2x3x22x22xf32, #tpu.memory_space<vmem>>, vector<1x1x16x16xf32>,
    %cst_48 = arith.constant 0.000000e+00 : f32
    %32 = vector.broadcast %cst_48 : f32 to vector<2x18x18xf32>
    %c0_49 = arith.constant 0 : index
    %33 = memref.load %arg1[%c0_49] : memref<1xf32, #tpu.memory_space<smem>>
    %34 = vector.broadcast %33 : f32 to vector<2x18x18xf32>
    %35 = arith.addf %32, %34 : vector<2x18x18xf32>
    %c0_50 = arith.constant 0 : index
    %c0_51 = arith.constant 0 : index
    %c0_52 = arith.constant 0 : index
    %c0_53 = arith.constant 0 : index
    %36 = vector.load %arg4[%c0_50, %c0_51, %c0_52, %c0_53] : memref<2x3x22x22xf32, #tpu.memory_space<vmem>>, vector<2x1x18x22xf32>
    %37 = vector.shape_cast %36 : vector<2x1x18x22xf32> to vector<2x18x22xf32>
    %c0_54 = arith.constant 0 : index
    %38 = memref.load %arg0[%c0_54] : memref<27xf32, #tpu.memory_space<smem>>
    %39 = vector.extract_strided_slice %37 {offsets = [0, 0, 0], sizes = [2, 18, 18], strides = [1, 1, 1]} : vector<2x18x22xf32> to vector<2x18x18xf32>
    %40 = vector.broadcast %38 : f32 to vector<2x18x18xf32>
    %41 = arith.mulf %39, %40 : vector<2x18x18xf32>
    %42 = arith.addf %35, %41 : vector<2x18x18xf32>
    %c1_55 = arith.constant 1 : index
    %43 = memref.load %arg0[%c1_55] : memref<27xf32, #tpu.memory_space<smem>>
    %44 = vector.extract_strided_slice %37 {offsets = [0, 0, 2], sizes = [2, 18, 18], strides = [1, 1, 1]} : vector<2x18x22xf32> to vector<2x18x18xf32>
    %45 = vector.broadcast %43 : f32 to vector<2x18x18xf32>
    %46 = arith.mulf %44, %45 : vector<2x18x18xf32>
    %47 = arith.addf %42, %46 : vector<2x18x18xf32>
    %c2_56 = arith.constant 2 : index
    %48 = memref.load %arg0[%c2_56] : memref<27xf32, #tpu.memory_space<smem>>
    %49 = vector.extract_strided_slice %37 {offsets = [0, 0, 4], sizes = [2, 18, 18], strides = [1, 1, 1]} : vector<2x18x22xf32> to vector<2x18x18xf32>
    %50 = vector.broadcast %48 : f32 to vector<2x18x18xf32>
    %51 = arith.mulf %49, %50 : vector<2x18x18xf32>
    %52 = arith.addf %47, %51 : vector<2x18x18xf32>
    %c0_57 = arith.constant 0 : index
    %c0_58 = arith.constant 0 : index
    %c2_59 = arith.constant 2 : index
    %c0_60 = arith.constant 0 : index
    %53 = vector.load %arg4[%c0_57, %c0_58, %c2_59, %c0_60] : memref<2x3x22x22xf32, #tpu.memory_space<vmem>>, vector<2x1x18x22xf32>
    %54 = vector.shape_cast %53 : vector<2x1x18x22xf32> to vector<2x18x22xf32>
    %c3_61 = arith.constant 3 : index
    %55 = memref.load %arg0[%c3_61] : memref<27xf32, #tpu.memory_space<smem>>
    %56 = vector.extract_strided_slice %54 {offsets = [0, 0, 0], sizes = [2, 18, 18], strides = [1, 1, 1]} : vector<2x18x22xf32> to vector<2x18x18xf32>
    %57 = vector.broadcast %55 : f32 to vector<2x18x18xf32>
    %58 = arith.mulf %56, %57 : vector<2x18x18xf32>
    %59 = arith.addf %52, %58 : vector<2x18x18xf32>
    %c4 = arith.constant 4 : index
    %60 = memref.load %arg0[%c4] : memref<27xf32, #tpu.memory_space<smem>>
    %61 = vector.extract_strided_slice %54 {offsets = [0, 0, 2], sizes = [2, 18, 18], strides = [1, 1, 1]} : vector<2x18x22xf32> to vector<2x18x18xf32>
    %62 = vector.broadcast %60 : f32 to vector<2x18x18xf32>
    %63 = arith.mulf %61, %62 : vector<2x18x18xf32>
    %64 = arith.addf %59, %63 : vector<2x18x18xf32>
    %c5 = arith.constant 5 : index
    %65 = memref.load %arg0[%c5] : memref<27xf32, #tpu.memory_space<smem>>
    %66 = vector.extract_strided_slice %54 {offsets = [0, 0, 4], sizes = [2, 18, 18], strides = [1, 1, 1]} : vector<2x18x22xf32> to vector<2x18x18xf32>
    %67 = vector.broadcast %65 : f32 to vector<2x18x18xf32>
    %68 = arith.mulf %66, %67 : vector<2x18x18xf32>
    %69 = arith.addf %64, %68 : vector<2x18x18xf32>
    %c0_62 = arith.constant 0 : index
    %c0_63 = arith.constant 0 : index
    %c4_64 = arith.constant 4 : index
    %c0_65 = arith.constant 0 : index
    %70 = vector.load %arg4[%c0_62, %c0_63, %c4_64, %c0_65] : memref<2x3x22x22xf32, #tpu.memory_space<vmem>>, vector<2x1x18x22xf32>
    %71 = vector.shape_cast %70 : vector<2x1x18x22xf32> to vector<2x18x22xf32>
    %c6 = arith.constant 6 : index
    %72 = memref.load %arg0[%c6] : memref<27xf32, #tpu.memory_space<smem>>
    %73 = vector.extract_strided_slice %71 {offsets = [0, 0, 0], sizes = [2, 18, 18], strides = [1, 1, 1]} : vector<2x18x22xf32> to vector<2x18x18xf32>
    %74 = vector.broadcast %72 : f32 to vector<2x18x18xf32>
    %75 = arith.mulf %73, %74 : vector<2x18x18xf32>
    %76 = arith.addf %69, %75 : vector<2x18x18xf32>
    %c7 = arith.constant 7 : index
    %77 = memref.load %arg0[%c7] : memref<27xf32, #tpu.memory_space<smem>>
    %78 = vector.extract_strided_slice %71 {offsets = [0, 0, 2], sizes = [2, 18, 18], strides = [1, 1, 1]} : vector<2x18x22xf32> to vector<2x18x18xf32>
    %79 = vector.broadcast %77 : f32 to vector<2x18x18xf32>
    %80 = arith.mulf %78, %79 : vector<2x18x18xf32>
    %81 = arith.addf %76, %80 : vector<2x18x18xf32>
    %c8 = arith.constant 8 : index
    %82 = memref.load %arg0[%c8] : memref<27xf32, #tpu.memory_space<smem>>
    %83 = vector.extract_strided_slice %71 {offsets = [0, 0, 4], sizes = [2, 18, 18], strides = [1, 1, 1]} : vector<2x18x22xf32> to vector<2x18x18xf32>
    %84 = vector.broadcast %82 : f32 to vector<2x18x18xf32>
    %85 = arith.mulf %83, %84 : vector<2x18x18xf32>
    %86 = arith.addf %81, %85 : vector<2x18x18xf32>
    %c0_66 = arith.constant 0 : index
    %c1_67 = arith.constant 1 : index
    %c0_68 = arith.constant 0 : index
    %c0_69 = arith.constant 0 : index
    %87 = vector.load %arg4[%c0_66, %c1_67, %c0_68, %c0_69] : memref<2x3x22x22xf32, #tpu.memory_space<vmem>>, vector<2x1x18x22xf32>
    %88 = vector.shape_cast %87 : vector<2x1x18x22xf32> to vector<2x18x22xf32>
    %c9 = arith.constant 9 : index
    %89 = memref.load %arg0[%c9] : memref<27xf32, #tpu.memory_space<smem>>
    %90 = vector.extract_strided_slice %88 {offsets = [0, 0, 0], sizes = [2, 18, 18], strides = [1, 1, 1]} : vector<2x18x22xf32> to vector<2x18x18xf32>
    %91 = vector.broadcast %89 : f32 to vector<2x18x18xf32>
    %92 = arith.mulf %90, %91 : vector<2x18x18xf32>
    %93 = arith.addf %86, %92 : vector<2x18x18xf32>
    %c10 = arith.constant 10 : index
    %94 = memref.load %arg0[%c10] : memref<27xf32, #tpu.memory_space<smem>>
    %95 = vector.extract_strided_slice %88 {offsets = [0, 0, 2], sizes = [2, 18, 18], strides = [1, 1, 1]} : vector<2x18x22xf32> to vector<2x18x18xf32>
    %96 = vector.broadcast %94 : f32 to vector<2x18x18xf32>
    %97 = arith.mulf %95, %96 : vector<2x18x18xf32>
    %98 = arith.addf %93, %97 : vector<2x18x18xf32>
    %c11 = arith.constant 11 : index
    %99 = memref.load %arg0[%c11] : memref<27xf32, #tpu.memory_space<smem>>
    %100 = vector.extract_strided_slice %88 {offsets = [0, 0, 4], sizes = [2, 18, 18], strides = [1, 1, 1]} : vector<2x18x22xf32> to vector<2x18x18xf32>
    %101 = vector.broadcast %99 : f32 to vector<2x18x18xf32>
    %102 = arith.mulf %100, %101 : vector<2x18x18xf32>
    %103 = arith.addf %98, %102 : vector<2x18x18xf32>
    %c0_70 = arith.constant 0 : index
    %c1_71 = arith.constant 1 : index
    %c2_72 = arith.constant 2 : index
    %c0_73 = arith.constant 0 : index
    %104 = vector.load %arg4[%c0_70, %c1_71, %c2_72, %c0_73] : memref<2x3x22x22xf32, #tpu.memory_space<vmem>>, vector<2x1x18x22xf32>
    %105 = vector.shape_cast %104 : vector<2x1x18x22xf32> to vector<2x18x22xf32>
    %c12 = arith.constant 12 : index
    %106 = memref.load %arg0[%c12] : memref<27xf32, #tpu.memory_space<smem>>
    %107 = vector.extract_strided_slice %105 {offsets = [0, 0, 0], sizes = [2, 18, 18], strides = [1, 1, 1]} : vector<2x18x22xf32> to vector<2x18x18xf32>
    %108 = vector.broadcast %106 : f32 to vector<2x18x18xf32>
    %109 = arith.mulf %107, %108 : vector<2x18x18xf32>
    %110 = arith.addf %103, %109 : vector<2x18x18xf32>
    %c13 = arith.constant 13 : index
    %111 = memref.load %arg0[%c13] : memref<27xf32, #tpu.memory_space<smem>>
    %112 = vector.extract_strided_slice %105 {offsets = [0, 0, 2], sizes = [2, 18, 18], strides = [1, 1, 1]} : vector<2x18x22xf32> to vector<2x18x18xf32>
    %113 = vector.broadcast %111 : f32 to vector<2x18x18xf32>
    %114 = arith.mulf %112, %113 : vector<2x18x18xf32>
    %115 = arith.addf %110, %114 : vector<2x18x18xf32>
    %c14 = arith.constant 14 : index
    %116 = memref.load %arg0[%c14] : memref<27xf32, #tpu.memory_space<smem>>
    %117 = vector.extract_strided_slice %105 {offsets = [0, 0, 4], sizes = [2, 18, 18], strides = [1, 1, 1]} : vector<2x18x22xf32> to vector<2x18x18xf32>
    %118 = vector.broadcast %116 : f32 to vector<2x18x18xf32>
    %119 = arith.mulf %117, %118 : vector<2x18x18xf32>
    %120 = arith.addf %115, %119 : vector<2x18x18xf32>
    %c0_74 = arith.constant 0 : index
    %c1_75 = arith.constant 1 : index
    %c4_76 = arith.constant 4 : index
    %c0_77 = arith.constant 0 : index
    %121 = vector.load %arg4[%c0_74, %c1_75, %c4_76, %c0_77] : memref<2x3x22x22xf32, #tpu.memory_space<vmem>>, vector<2x1x18x22xf32>
    %122 = vector.shape_cast %121 : vector<2x1x18x22xf32> to vector<2x18x22xf32>
    %c15 = arith.constant 15 : index
    %123 = memref.load %arg0[%c15] : memref<27xf32, #tpu.memory_space<smem>>
    %124 = vector.extract_strided_slice %122 {offsets = [0, 0, 0], sizes = [2, 18, 18], strides = [1, 1, 1]} : vector<2x18x22xf32> to vector<2x18x18xf32>
    %125 = vector.broadcast %123 : f32 to vector<2x18x18xf32>
    %126 = arith.mulf %124, %125 : vector<2x18x18xf32>
    %127 = arith.addf %120, %126 : vector<2x18x18xf32>
    %c16 = arith.constant 16 : index
    %128 = memref.load %arg0[%c16] : memref<27xf32, #tpu.memory_space<smem>>
    %129 = vector.extract_strided_slice %122 {offsets = [0, 0, 2], sizes = [2, 18, 18], strides = [1, 1, 1]} : vector<2x18x22xf32> to vector<2x18x18xf32>
    %130 = vector.broadcast %128 : f32 to vector<2x18x18xf32>
    %131 = arith.mulf %129, %130 : vector<2x18x18xf32>
    %132 = arith.addf %127, %131 : vector<2x18x18xf32>
    %c17 = arith.constant 17 : index
    %133 = memref.load %arg0[%c17] : memref<27xf32, #tpu.memory_space<smem>>
    %134 = vector.extract_strided_slice %122 {offsets = [0, 0, 4], sizes = [2, 18, 18], strides = [1, 1, 1]} : vector<2x18x22xf32> to vector<2x18x18xf32>
    %135 = vector.broadcast %133 : f32 to vector<2x18x18xf32>
    %136 = arith.mulf %134, %135 : vector<2x18x18xf32>
    %137 = arith.addf %132, %136 : vector<2x18x18xf32>
    %c0_78 = arith.constant 0 : index
    %c2_79 = arith.constant 2 : index
    %c0_80 = arith.constant 0 : index
    %c0_81 = arith.constant 0 : index
    %138 = vector.load %arg4[%c0_78, %c2_79, %c0_80, %c0_81] : memref<2x3x22x22xf32, #tpu.memory_space<vmem>>, vector<2x1x18x22xf32>
    %139 = vector.shape_cast %138 : vector<2x1x18x22xf32> to vector<2x18x22xf32>
    %c18 = arith.constant 18 : index
    %140 = memref.load %arg0[%c18] : memref<27xf32, #tpu.memory_space<smem>>
    %141 = vector.extract_strided_slice %139 {offsets = [0, 0, 0], sizes = [2, 18, 18], strides = [1, 1, 1]} : vector<2x18x22xf32> to vector<2x18x18xf32>
    %142 = vector.broadcast %140 : f32 to vector<2x18x18xf32>
    %143 = arith.mulf %141, %142 : vector<2x18x18xf32>
    %144 = arith.addf %137, %143 : vector<2x18x18xf32>
    %c19 = arith.constant 19 : index
    %145 = memref.load %arg0[%c19] : memref<27xf32, #tpu.memory_space<smem>>
    %146 = vector.extract_strided_slice %139 {offsets = [0, 0, 2], sizes = [2, 18, 18], strides = [1, 1, 1]} : vector<2x18x22xf32> to vector<2x18x18xf32>
    %147 = vector.broadcast %145 : f32 to vector<2x18x18xf32>
    %148 = arith.mulf %146, %147 : vector<2x18x18xf32>
    %149 = arith.addf %144, %148 : vector<2x18x18xf32>
    %c20 = arith.constant 20 : index
    %150 = memref.load %arg0[%c20] : memref<27xf32, #tpu.memory_space<smem>>
    %151 = vector.extract_strided_slice %139 {offsets = [0, 0, 4], sizes = [2, 18, 18], strides = [1, 1, 1]} : vector<2x18x22xf32> to vector<2x18x18xf32>
    %152 = vector.broadcast %150 : f32 to vector<2x18x18xf32>
    %153 = arith.mulf %151, %152 : vector<2x18x18xf32>
    %154 = arith.addf %149, %153 : vector<2x18x18xf32>
    %c0_82 = arith.constant 0 : index
    %c2_83 = arith.constant 2 : index
    %c2_84 = arith.constant 2 : index
    %c0_85 = arith.constant 0 : index
    %155 = vector.load %arg4[%c0_82, %c2_83, %c2_84, %c0_85] : memref<2x3x22x22xf32, #tpu.memory_space<vmem>>, vector<2x1x18x22xf32>
    %156 = vector.shape_cast %155 : vector<2x1x18x22xf32> to vector<2x18x22xf32>
    %c21 = arith.constant 21 : index
    %157 = memref.load %arg0[%c21] : memref<27xf32, #tpu.memory_space<smem>>
    %158 = vector.extract_strided_slice %156 {offsets = [0, 0, 0], sizes = [2, 18, 18], strides = [1, 1, 1]} : vector<2x18x22xf32> to vector<2x18x18xf32>
    %159 = vector.broadcast %157 : f32 to vector<2x18x18xf32>
    %160 = arith.mulf %158, %159 : vector<2x18x18xf32>
    %161 = arith.addf %154, %160 : vector<2x18x18xf32>
    %c22 = arith.constant 22 : index
    %162 = memref.load %arg0[%c22] : memref<27xf32, #tpu.memory_space<smem>>
    %163 = vector.extract_strided_slice %156 {offsets = [0, 0, 2], sizes = [2, 18, 18], strides = [1, 1, 1]} : vector<2x18x22xf32> to vector<2x18x18xf32>
    %164 = vector.broadcast %162 : f32 to vector<2x18x18xf32>
    %165 = arith.mulf %163, %164 : vector<2x18x18xf32>
    %166 = arith.addf %161, %165 : vector<2x18x18xf32>
    %c23 = arith.constant 23 : index
    %167 = memref.load %arg0[%c23] : memref<27xf32, #tpu.memory_space<smem>>
    %168 = vector.extract_strided_slice %156 {offsets = [0, 0, 4], sizes = [2, 18, 18], strides = [1, 1, 1]} : vector<2x18x22xf32> to vector<2x18x18xf32>
    %169 = vector.broadcast %167 : f32 to vector<2x18x18xf32>
    %170 = arith.mulf %168, %169 : vector<2x18x18xf32>
    %171 = arith.addf %166, %170 : vector<2x18x18xf32>
    %c0_86 = arith.constant 0 : index
    %c2_87 = arith.constant 2 : index
    %c4_88 = arith.constant 4 : index
    %c0_89 = arith.constant 0 : index
    %172 = vector.load %arg4[%c0_86, %c2_87, %c4_88, %c0_89] : memref<2x3x22x22xf32, #tpu.memory_space<vmem>>, vector<2x1x18x22xf32>
    %173 = vector.shape_cast %172 : vector<2x1x18x22xf32> to vector<2x18x22xf32>
    %c24 = arith.constant 24 : index
    %174 = memref.load %arg0[%c24] : memref<27xf32, #tpu.memory_space<smem>>
    %175 = vector.extract_strided_slice %173 {offsets = [0, 0, 0], sizes = [2, 18, 18], strides = [1, 1, 1]} : vector<2x18x22xf32> to vector<2x18x18xf32>
    %176 = vector.broadcast %174 : f32 to vector<2x18x18xf32>
    %177 = arith.mulf %175, %176 : vector<2x18x18xf32>
    %178 = arith.addf %171, %177 : vector<2x18x18xf32>
    %c25 = arith.constant 25 : index
    %179 = memref.load %arg0[%c25] : memref<27xf32, #tpu.memory_space<smem>>
    %180 = vector.extract_strided_slice %173 {offsets = [0, 0, 2], sizes = [2, 18, 18], strides = [1, 1, 1]} : vector<2x18x22xf32> to vector<2x18x18xf32>
    %181 = vector.broadcast %179 : f32 to vector<2x18x18xf32>
    %182 = arith.mulf %180, %181 : vector<2x18x18xf32>
    %183 = arith.addf %178, %182 : vector<2x18x18xf32>
    %c26 = arith.constant 26 : index
    %184 = memref.load %arg0[%c26] : memref<27xf32, #tpu.memory_space<smem>>
    %185 = vector.extract_strided_slice %173 {offsets = [0, 0, 4], sizes = [2, 18, 18], strides = [1, 1, 1]} : vector<2x18x22xf32> to vector<2x18x18xf32>
    %186 = vector.broadcast %184 : f32 to vector<2x18x18xf32>
    %187 = arith.mulf %185, %186 : vector<2x18x18xf32>
    %188 = arith.addf %183, %187 : vector<2x18x18xf32>
    %189 = vector.extract_strided_slice %188 {offsets = [0, 0, 0], sizes = [2, 1, 18], strides = [1, 1, 1]} : vector<2x18x18xf32> to vector<2x1x18xf32>
    %190 = vector.extract_strided_slice %188 {offsets = [0, 0, 0], sizes = [2, 17, 18], strides = [1, 1, 1]} : vector<2x18x18xf32> to vector<2x17x18xf32>
    %191 = tpu.concatenate %189, %190 in 1 : vector<2x1x18xf32>, vector<2x17x18xf32> -> vector<2x18x18xf32>
    %192 = vector.extract_strided_slice %188 {offsets = [0, 1, 0], sizes = [2, 17, 18], strides = [1, 1, 1]} : vector<2x18x18xf32> to vector<2x17x18xf32>
    %193 = vector.extract_strided_slice %188 {offsets = [0, 17, 0], sizes = [2, 1, 18], strides = [1, 1, 1]} : vector<2x18x18xf32> to vector<2x1x18xf32>
    %194 = tpu.concatenate %192, %193 in 1 : vector<2x17x18xf32>, vector<2x1x18xf32> -> vector<2x18x18xf32>
    %195 = arith.maximumf %188, %191 : vector<2x18x18xf32>
    %196 = arith.maximumf %195, %194 : vector<2x18x18xf32>
    %197 = vector.extract_strided_slice %196 {offsets = [0, 0, 0], sizes = [2, 18, 1], strides = [1, 1, 1]} : vector<2x18x18xf32> to vector<2x18x1xf32>
    %198 = vector.extract_strided_slice %196 {offsets = [0, 0, 0], sizes = [2, 18, 17], strides = [1, 1, 1]} : vector<2x18x18xf32> to vector<2x18x17xf32>
    %199 = tpu.concatenate %197, %198 in 2 : vector<2x18x1xf32>, vector<2x18x17xf32> -> vector<2x18x18xf32>
    %200 = vector.extract_strided_slice %196 {offsets = [0, 0, 1], sizes = [2, 18, 17], strides = [1, 1, 1]} : vector<2x18x18xf32> to vector<2x18x17xf32>
    %201 = vector.extract_strided_slice %196 {offsets = [0, 0, 17], sizes = [2, 18, 1], strides = [1, 1, 1]} : vector<2x18x18xf32> to vector<2x18x1xf32>
    %202 = tpu.concatenate %200, %201 in 2 : vector<2x18x17xf32>, vector<2x18x1xf32> -> vector<2x18x18xf32>
    %203 = arith.maximumf %196, %199 : vector<2x18x18xf32>
    %204 = arith.maximumf %203, %202 : vector<2x18x18xf32>
    %205 = tpu.iota {dimensions = array<i32: 0>} : vector<9x18xi32>
    %206 = tpu.iota {dimensions = array<i32: 1>} : vector<9x18xi32>
    %c2_i32 = arith.constant 2 : i32
    %207 = vector.broadcast %c2_i32 : i32 to vector<9x18xi32>
    %208 = arith.muli %207, %205 : vector<9x18xi32>
    %209 = arith.cmpi eq, %206, %208 : vector<9x18xi32>
    %210 = arith.extui %209 : vector<9x18xi1> to vector<9x18xi32>
    %211 = arith.sitofp %210 : vector<9x18xi32> to vector<9x18xf32>
    %212 = tpu.iota {dimensions = array<i32: 0>} : vector<18x9xi32>
    %213 = tpu.iota {dimensions = array<i32: 1>} : vector<18x9xi32>
    %c2_i32_90 = arith.constant 2 : i32
    %214 = vector.broadcast %c2_i32_90 : i32 to vector<18x9xi32>
    %215 = arith.muli %214, %213 : vector<18x9xi32>
    %216 = arith.cmpi eq, %212, %215 : vector<18x9xi32>
    %217 = arith.extui %216 : vector<18x9xi1> to vector<18x9xi32>
    %218 = arith.sitofp %217 : vector<18x9xi32> to vector<18x9xf32>
    %219 = vector.extract_strided_slice %204 {offsets = [0, 0, 0], sizes = [1, 18, 18], strides = [1, 1, 1]} : vector<2x18x18xf32> to vector<1x18x18xf32>
    %220 = vector.shape_cast %219 : vector<1x18x18xf32> to vector<18x18xf32>
    %cst_91 = arith.constant dense<0.000000e+00> : vector<9x18xf32>
    %221 = tpu.matmul %211, %220, %cst_91 {dimension_numbers = #tpu.dot_dimension_numbers<[1], [0], [0], [1], [0, 0, 1, 1], [], []>} : vector<9x18xf32>, vector<18x18xf32>, vector<9x18xf32> -> vector<9x18xf32>
    %cst_92 = arith.constant dense<0.000000e+00> : vector<9x9xf32>
    %222 = tpu.matmul %221, %218, %cst_92 {dimension_numbers = #tpu.dot_dimension_numbers<[1], [0], [0], [1], [0, 0, 1, 1], [], []>} : vector<9x18xf32>, vector<18x9xf32>, vector<9x9xf32> -> vector<9x9xf32>
    %cst_93 = arith.constant 0.000000e+00 : f32
    %cst_94 = arith.constant 6.000000e+00 : f32
    %223 = vector.broadcast %cst_93 : f32 to vector<9x9xf32>
    %224 = arith.maximumf %223, %222 : vector<9x9xf32>
    %225 = vector.broadcast %cst_94 : f32 to vector<9x9xf32>
    %226 = arith.minimumf %225, %224 : vector<9x9xf32>
    %c0_95 = arith.constant 0 : index
    %c0_96 = arith.constant 0 : index
    %c0_97 = arith.constant 0 : index
    %227 = vector.load %arg3[%c0_95, %c0_96, %c0_97] : memref<2x9x9xf32, #tpu.memory_space<vmem>>, vector<1x9x9xf32>
    %228 = vector.shape_cast %227 : vector<1x9x9xf32> to vector<9x9xf32>
    %229 = vector.shape_cast %226 : vector<9x9xf32> to vector<1x9x9xf32>
    tpu.vector_store %arg3[%c0_95, %c0_96, %c0_97], %229 {strides = array<i32>} : memref<2x9x9xf32, #tpu.memory_space<vmem>>, vector<1x9x9xf32>,
    %230 = vector.extract_strided_slice %204 {offsets = [1, 0, 0], sizes = [1, 18, 18], strides = [1, 1, 1]} : vector<2x18x18xf32> to vector<1x18x18xf32>
    %231 = vector.shape_cast %230 : vector<1x18x18xf32> to vector<18x18xf32>
    %cst_98 = arith.constant dense<0.000000e+00> : vector<9x18xf32>
    %232 = tpu.matmul %211, %231, %cst_98 {dimension_numbers = #tpu.dot_dimension_numbers<[1], [0], [0], [1], [0, 0, 1, 1], [], []>} : vector<9x18xf32>, vector<18x18xf32>, vector<9x18xf32> -> vector<9x18xf32>
    %cst_99 = arith.constant dense<0.000000e+00> : vector<9x9xf32>
    %233 = tpu.matmul %232, %218, %cst_99 {dimension_numbers = #tpu.dot_dimension_numbers<[1], [0], [0], [1], [0, 0, 1, 1], [], []>} : vector<9x18xf32>, vector<18x9xf32>, vector<9x9xf32> -> vector<9x9xf32>
    %cst_100 = arith.constant 0.000000e+00 : f32
    %cst_101 = arith.constant 6.000000e+00 : f32
    %234 = vector.broadcast %cst_100 : f32 to vector<9x9xf32>
    %235 = arith.maximumf %234, %233 : vector<9x9xf32>
    %236 = vector.broadcast %cst_101 : f32 to vector<9x9xf32>
    %237 = arith.minimumf %236, %235 : vector<9x9xf32>
    %c1_102 = arith.constant 1 : index
    %c0_103 = arith.constant 0 : index
    %c0_104 = arith.constant 0 : index
    %238 = vector.load %arg3[%c1_102, %c0_103, %c0_104] : memref<2x9x9xf32, #tpu.memory_space<vmem>>, vector<1x9x9xf32>
    %239 = vector.shape_cast %238 : vector<1x9x9xf32> to vector<9x9xf32>
    %240 = vector.shape_cast %237 : vector<9x9xf32> to vector<1x9x9xf32>
    tpu.vector_store %arg3[%c1_102, %c0_103, %c0_104], %240 {strides = array<i32>} : memref<2x9x9xf32, #tpu.memory_space<vmem>>, vector<1x9x9xf32>,
    return
  }
}

</mosaic_0001>

<llo_original>
// kernel: tpu_custom_call.1
$region0: #{tpu_custom_call.1}
  #allocation0 [shape = 'u32[]', space=smem, size = 0x4, offset = 0x4, fixed_abs, tag = 'smem constant byte address 0x4 - core index']
  #allocation1 [shape = 'u32[144,128]{1,0:T(1,128)}', space=vmem, size = 0x12000, scoped, tag = 'internal scratch']
  #allocation2 [shape = 'f32[2,3,22,22]{3,2,1,0:T(8,128)}', space=vmem, size = 0x12000, scoped, tag = 'scratch operand']
  #allocation3 [shape = 'f32[1]{0:T(128)S(6)}', space=smem, size = 0x200, scoped, tag = 'scoped memory for tpu_custom_call.1']
  %s0 = inlined_call_operand.vmem [shape: f32[27], index: 0, kind: input, shape index: {}]
  %s1 = inlined_call_operand.<no memory space> [shape: f32[1], index: 1, kind: input, shape index: {}]
  %s2 = inlined_call_operand.hbm [shape: f32[2,3,16,16], index: 2, kind: input, shape index: {}]
  %s3 = inlined_call_operand.vmem [shape: f32[2,9,9], index: 3, kind: output, shape index: {}]
  %s4 = sld [smem:[#allocation0]]
  $region30: #{tpu_custom_call.1} parent=0
    _
  %s6 = ssub.s32 1, %s4
  %s7 = scalar_select 0, %s6, %s4
  %8 = sst [smem:[#allocation3]] %s1
  $region1: #{tpu_custom_call.1} parent=0
    #allocation4 [shape = 'u8[512]{0}', space=smem, size = 0x200, scoped, tag = 'input window, operand 0, single buffered']
    #allocation5 [shape = 's32[1]{0}', space=sflag, size = 0x4, scoped, tag = 'scoped memory for tpu_custom_call.1']
    #allocation6 [shape = 's32[1]{0}', space=sflag, size = 0x4, scoped, tag = 'scoped memory for tpu_custom_call.1']
    #allocation7 [shape = 'u8[49152]{0}', space=vmem, size = 0xc000, scoped, tag = 'input window, operand 2, single buffered']
    %9 = vsyncpa [#allocation6], 0
    %10 = vsyncpa [#allocation5], 0
    // Predicated region
    $region2: #{tpu_custom_call.1} parent=1 // pred_check
      _
    $region3: #{tpu_custom_call.1} parent=1 // pred_check_branch
      %12 = sbr.rel (0) target = $region5
    $region4: #{tpu_custom_call.1} parent=1 // pred_region
      %s14 = ssub.s32 16, 16
      %15 = vsyncadd [#allocation6], %s14
      %s17 = sshll.u32 %s0, 4
      %s18 = int_to_ptr.vmem [resolvable:$true] %s17
      %20 = dma.vmem_to_smem %s18, 16, [#allocation4], [#allocation6]
    $region5: #{tpu_custom_call.1} parent=1 // pred_fallthru
      _
    // Predicated region
    $region6: #{tpu_custom_call.1} parent=1 // pred_check
      _
    $region7: #{tpu_custom_call.1} parent=1 // pred_check_branch
      %22 = sbr.rel (0) target = $region9
    $region8: #{tpu_custom_call.1} parent=1 // pred_region
      _
    $region9: #{tpu_custom_call.1} parent=1 // pred_fallthru
      _
    // Predicated region
    $region10: #{tpu_custom_call.1} parent=1 // pred_check
      _
    $region11: #{tpu_custom_call.1} parent=1 // pred_check_branch
      %24 = sbr.rel (0) target = $region13
    $region12: #{tpu_custom_call.1} parent=1 // pred_region
      %s26 = ssub.s32 1536, 1536
      %27 = vsyncadd [#allocation5], %s26
      %s28 = sshll.u32 [#allocation7], 4
      %s29 = int_to_ptr.vmem [resolvable:$true] %s28
      %34 = dma.hbm_to_vmem [thread:$0]  %s2, 1536, %s29, [#allocation5], 128, 128, 8
    $region13: #{tpu_custom_call.1} parent=1 // pred_fallthru
      _
    // Predicated region
    $region14: #{tpu_custom_call.1} parent=1 // pred_check
      _
    $region15: #{tpu_custom_call.1} parent=1 // pred_check_branch
      %36 = sbr.rel (0) target = $region17
    $region16: #{tpu_custom_call.1} parent=1 // pred_region
      %37 = dma.done [#allocation6], 16
    $region17: #{tpu_custom_call.1} parent=1 // pred_fallthru
      _
    // Predicated region
    $region18: #{tpu_custom_call.1} parent=1 // pred_check
      _
    $region19: #{tpu_custom_call.1} parent=1 // pred_check_branch
      %39 = sbr.rel (0) target = $region21
    $region20: #{tpu_custom_call.1} parent=1 // pred_region
      %40 = dma.done [#allocation5], 1536
    $region21: #{tpu_custom_call.1} parent=1 // pred_fallthru
      _
    %41 = sfence
    %vm42 = vcmask 179200
    %43 = vst.msk [vmem:[#allocation2] sm:$0xff] %vm42, 0.0
    %44 = vst.msk [vmem:[#allocation2 + $0x8] sm:$0xff] %vm42, 0.0
    %vm45 = vcmask 177152
    %46 = vst.msk [vmem:[#allocation2 + $0x10] sm:$0x3f] %vm45, 0.0
    %47 = vst.msk [vmem:[#allocation2 + $0x18] sm:$0xff] %vm42, 0.0
    %48 = vst.msk [vmem:[#allocation2 + $0x20] sm:$0xff] %vm42, 0.0
    %49 = vst.msk [vmem:[#allocation2 + $0x28] sm:$0x3f] %vm45, 0.0
    %50 = vst.msk [vmem:[#allocation2 + $0x30] sm:$0xff] %vm42, 0.0
    %51 = vst.msk [vmem:[#allocation2 + $0x38] sm:$0xff] %vm42, 0.0
    %52 = vst.msk [vmem:[#allocation2 + $0x40] sm:$0x3f] %vm45, 0.0
    %53 = vst.msk [vmem:[#allocation2 + $0x48] sm:$0xff] %vm42, 0.0
    %54 = vst.msk [vmem:[#allocation2 + $0x50] sm:$0xff] %vm42, 0.0
    %55 = vst.msk [vmem:[#allocation2 + $0x58] sm:$0x3f] %vm45, 0.0
    %56 = vst.msk [vmem:[#allocation2 + $0x60] sm:$0xff] %vm42, 0.0
    %57 = vst.msk [vmem:[#allocation2 + $0x68] sm:$0xff] %vm42, 0.0
    %58 = vst.msk [vmem:[#allocation2 + $0x70] sm:$0x3f] %vm45, 0.0
    %59 = vst.msk [vmem:[#allocation2 + $0x78] sm:$0xff] %vm42, 0.0
    %60 = vst.msk [vmem:[#allocation2 + $0x80] sm:$0xff] %vm42, 0.0
    %61 = vst.msk [vmem:[#allocation2 + $0x88] sm:$0x3f] %vm45, 0.0
    %v62 = vld [vmem:[#allocation7] sm:$0xff]
    %v63 = vld [vmem:[#allocation7 + $0x8] sm:$0xff]
    %66 = vrot.lane.b32.xlu0 %v62, 3
    %v67 = vpop.permute.xlu0 %66
    %68 = vrot.lane.b32.xlu0 %v63, 3
    %v69 = vpop.permute.xlu0 %68
    %vm72 = vcmask 154648
    %73 = vst.msk [vmem:[#allocation2 + $0x3] sm:$0xff] %vm72, %v67
    %74 = vst.msk [vmem:[#allocation2 + $0xb] sm:$0xff] %vm72, %v69
    %s75 = scalar_lea.vmem [#allocation7], 16
    %v76 = vld [vmem:[%s75] sm:$0xff]
    %v77 = vld [vmem:[%s75 + $0x8] sm:$0xff]
    %80 = vrot.lane.b32.xlu0 %v76, 3
    %v81 = vpop.permute.xlu0 %80
    %82 = vrot.lane.b32.xlu0 %v77, 3
    %v83 = vpop.permute.xlu0 %82
    %s86 = scalar_lea.vmem [#allocation2], 24
    %87 = vst.msk [vmem:[%s86 + $0x3] sm:$0xff] %vm72, %v81
    %88 = vst.msk [vmem:[%s86 + $0xb] sm:$0xff] %vm72, %v83
    %s89 = scalar_lea.vmem [#allocation7], 32
    %v90 = vld [vmem:[%s89] sm:$0xff]
    %v91 = vld [vmem:[%s89 + $0x8] sm:$0xff]
    %94 = vrot.lane.b32.xlu0 %v90, 3
    %v95 = vpop.permute.xlu0 %94
    %96 = vrot.lane.b32.xlu0 %v91, 3
    %v97 = vpop.permute.xlu0 %96
    %s100 = scalar_lea.vmem [#allocation2], 48
    %101 = vst.msk [vmem:[%s100 + $0x3] sm:$0xff] %vm72, %v95
    %102 = vst.msk [vmem:[%s100 + $0xb] sm:$0xff] %vm72, %v97
    %s103 = scalar_lea.vmem [#allocation7], 48
    %v104 = vld [vmem:[%s103] sm:$0xff]
    %v105 = vld [vmem:[%s103 + $0x8] sm:$0xff]
    %108 = vrot.lane.b32.xlu0 %v104, 3
    %v109 = vpop.permute.xlu0 %108
    %110 = vrot.lane.b32.xlu0 %v105, 3
    %v111 = vpop.permute.xlu0 %110
    %s114 = scalar_lea.vmem [#allocation2], 72
    %115 = vst.msk [vmem:[%s114 + $0x3] sm:$0xff] %vm72, %v109
    %116 = vst.msk [vmem:[%s114 + $0xb] sm:$0xff] %vm72, %v111
    %s117 = scalar_lea.vmem [#allocation7], 64
    %v118 = vld [vmem:[%s117] sm:$0xff]
    %v119 = vld [vmem:[%s117 + $0x8] sm:$0xff]
    %122 = vrot.lane.b32.xlu0 %v118, 3
    %v123 = vpop.permute.xlu0 %122
    %124 = vrot.lane.b32.xlu0 %v119, 3
    %v125 = vpop.permute.xlu0 %124
    %s128 = scalar_lea.vmem [#allocation2], 96
    %129 = vst.msk [vmem:[%s128 + $0x3] sm:$0xff] %vm72, %v123
    %130 = vst.msk [vmem:[%s128 + $0xb] sm:$0xff] %vm72, %v125
    %s131 = scalar_lea.vmem [#allocation7], 80
    %v132 = vld [vmem:[%s131] sm:$0xff]
    %v133 = vld [vmem:[%s131 + $0x8] sm:$0xff]
    %136 = vrot.lane.b32.xlu0 %v132, 3
    %v137 = vpop.permute.xlu0 %136
    %138 = vrot.lane.b32.xlu0 %v133, 3
    %v139 = vpop.permute.xlu0 %138
    %s142 = scalar_lea.vmem [#allocation2], 120
    %143 = vst.msk [vmem:[%s142 + $0x3] sm:$0xff] %vm72, %v137
    %144 = vst.msk [vmem:[%s142 + $0xb] sm:$0xff] %vm72, %v139
    %s145 = sld [smem:[#allocation3]]
    %v146 = vstv %s145
    %v147 = vadd.f32 %v146, 0.0
    %v148 = vld [vmem:[#allocation2] sm:$0xff]
    %v149 = vld [vmem:[#allocation2 + $0x8] sm:$0xff]
    %v150 = vld [vmem:[#allocation2 + $0x10] sm:$0x3]
    %v151 = vld [vmem:[#allocation2 + $0x48] sm:$0xff]
    %v152 = vld [vmem:[#allocation2 + $0x50] sm:$0xff]
    %v153 = vld [vmem:[#allocation2 + $0x58] sm:$0x3]
    %s154 = sld [smem:[#allocation4]]
    %v155 = vstv %s154
    %v156 = vmul.f32 %v148, %v155
    %v157 = vmul.f32 %v149, %v155
    %v158 = vmul.f32 %v150, %v155
    %v159 = vmul.f32 %v151, %v155
    %v160 = vmul.f32 %v152, %v155
    %v161 = vmul.f32 %v153, %v155
    %v162 = vadd.f32 %v147, %v156
    %v163 = vadd.f32 %v147, %v157
    %v164 = vadd.f32 %v147, %v158
    %v165 = vadd.f32 %v147, %v159
    %v166 = vadd.f32 %v147, %v160
    %v167 = vadd.f32 %v147, %v161
    %s168 = sld [smem:[#allocation4 + $0x1]]
    %v169 = vstv %s168
    %v170 = vmul.f32 %v148, %v169
    %v171 = vmul.f32 %v149, %v169
    %v172 = vmul.f32 %v150, %v169
    %v173 = vmul.f32 %v151, %v169
    %v174 = vmul.f32 %v152, %v169
    %v175 = vmul.f32 %v153, %v169
    %182 = vrot.lane.b32.xlu0 %v170, 126
    %v183 = vpop.permute.xlu0 %182
    %184 = vrot.lane.b32.xlu0 %v171, 126
    %v185 = vpop.permute.xlu0 %184
    %186 = vrot.lane.b32.xlu0 %v172, 126
    %v187 = vpop.permute.xlu0 %186
    %188 = vrot.lane.b32.xlu0 %v173, 126
    %v189 = vpop.permute.xlu0 %188
    %190 = vrot.lane.b32.xlu0 %v174, 126
    %v191 = vpop.permute.xlu0 %190
    %192 = vrot.lane.b32.xlu0 %v175, 126
    %v193 = vpop.permute.xlu0 %192
    %v200 = vadd.f32 %v162, %v183
    %v201 = vadd.f32 %v163, %v185
    %v202 = vadd.f32 %v164, %v187
    %v203 = vadd.f32 %v165, %v189
    %v204 = vadd.f32 %v166, %v191
    %v205 = vadd.f32 %v167, %v193
    %s206 = sld [smem:[#allocation4 + $0x2]]
    %v207 = vstv %s206
    %v208 = vmul.f32 %v148, %v207
    %v209 = vmul.f32 %v149, %v207
    %v210 = vmul.f32 %v150, %v207
    %v211 = vmul.f32 %v151, %v207
    %v212 = vmul.f32 %v152, %v207
    %v213 = vmul.f32 %v153, %v207
    %220 = vrot.lane.b32.xlu0 %v208, 124
    %v221 = vpop.permute.xlu0 %220
    %222 = vrot.lane.b32.xlu0 %v209, 124
    %v223 = vpop.permute.xlu0 %222
    %224 = vrot.lane.b32.xlu0 %v210, 124
    %v225 = vpop.permute.xlu0 %224
    %226 = vrot.lane.b32.xlu0 %v211, 124
    %v227 = vpop.permute.xlu0 %226
    %228 = vrot.lane.b32.xlu0 %v212, 124
    %v229 = vpop.permute.xlu0 %228
    %230 = vrot.lane.b32.xlu0 %v213, 124
    %v231 = vpop.permute.xlu0 %230
    %v238 = vadd.f32 %v200, %v221
    %v239 = vadd.f32 %v201, %v223
    %v240 = vadd.f32 %v202, %v225
    %v241 = vadd.f32 %v203, %v227
    %v242 = vadd.f32 %v204, %v229
    %v243 = vadd.f32 %v205, %v231
    %v244 = vld [vmem:[#allocation2 + $0x2] sm:$0xff]
    %v245 = vld [vmem:[#allocation2 + $0xa] sm:$0xff]
    %v246 = vld [vmem:[#allocation2 + $0x12] sm:$0x3]
    %v247 = vld [vmem:[#allocation2 + $0x4a] sm:$0xff]
    %v248 = vld [vmem:[#allocation2 + $0x52] sm:$0xff]
    %v249 = vld [vmem:[#allocation2 + $0x5a] sm:$0x3]
    %s250 = sld [smem:[#allocation4 + $0x3]]
    %v251 = vstv %s250
    %v252 = vmul.f32 %v244, %v251
    %v253 = vmul.f32 %v245, %v251
    %v254 = vmul.f32 %v246, %v251
    %v255 = vmul.f32 %v247, %v251
    %v256 = vmul.f32 %v248, %v251
    %v257 = vmul.f32 %v249, %v251
    %v258 = vadd.f32 %v238, %v252
    %v259 = vadd.f32 %v239, %v253
    %v260 = vadd.f32 %v240, %v254
    %v261 = vadd.f32 %v241, %v255
    %v262 = vadd.f32 %v242, %v256
    %v263 = vadd.f32 %v243, %v257
    %s264 = sld [smem:[#allocation4 + $0x4]]
    %v265 = vstv %s264
    %v266 = vmul.f32 %v244, %v265
    %v267 = vmul.f32 %v245, %v265
    %v268 = vmul.f32 %v246, %v265
    %v269 = vmul.f32 %v247, %v265
    %v270 = vmul.f32 %v248, %v265
    %v271 = vmul.f32 %v249, %v265
    %278 = vrot.lane.b32.xlu0 %v266, 126
    %v279 = vpop.permute.xlu0 %278
    %280 = vrot.lane.b32.xlu0 %v267, 126
    %v281 = vpop.permute.xlu0 %280
    %282 = vrot.lane.b32.xlu0 %v268, 126
    %v283 = vpop.permute.xlu0 %282
    %284 = vrot.lane.b32.xlu0 %v269, 126
    %v285 = vpop.permute.xlu0 %284
    %286 = vrot.lane.b32.xlu0 %v270, 126
    %v287 = vpop.permute.xlu0 %286
    %288 = vrot.lane.b32.xlu0 %v271, 126
    %v289 = vpop.permute.xlu0 %288
    %v296 = vadd.f32 %v258, %v279
    %v297 = vadd.f32 %v259, %v281
    %v298 = vadd.f32 %v260, %v283
    %v299 = vadd.f32 %v261, %v285
    %v300 = vadd.f32 %v262, %v287
    %v301 = vadd.f32 %v263, %v289
    %s302 = sld [smem:[#allocation4 + $0x5]]
    %v303 = vstv %s302
    %v304 = vmul.f32 %v244, %v303
    %v305 = vmul.f32 %v245, %v303
    %v306 = vmul.f32 %v246, %v303
    %v307 = vmul.f32 %v247, %v303
    %v308 = vmul.f32 %v248, %v303
    %v309 = vmul.f32 %v249, %v303
    %316 = vrot.lane.b32.xlu0 %v304, 124
    %v317 = vpop.permute.xlu0 %316
    %318 = vrot.lane.b32.xlu0 %v305, 124
    %v319 = vpop.permute.xlu0 %318
    %320 = vrot.lane.b32.xlu0 %v306, 124
    %v321 = vpop.permute.xlu0 %320
    %322 = vrot.lane.b32.xlu0 %v307, 124
    %v323 = vpop.permute.xlu0 %322
    %324 = vrot.lane.b32.xlu0 %v308, 124
    %v325 = vpop.permute.xlu0 %324
    %326 = vrot.lane.b32.xlu0 %v309, 124
    %v327 = vpop.permute.xlu0 %326
    %v334 = vadd.f32 %v296, %v317
    %v335 = vadd.f32 %v297, %v319
    %v336 = vadd.f32 %v298, %v321
    %v337 = vadd.f32 %v299, %v323
    %v338 = vadd.f32 %v300, %v325
    %v339 = vadd.f32 %v301, %v327
    %v340 = vld [vmem:[#allocation2 + $0x4] sm:$0xff]
    %v341 = vld [vmem:[#allocation2 + $0xc] sm:$0xff]
    %v342 = vld [vmem:[#allocation2 + $0x14] sm:$0x3]
    %v343 = vld [vmem:[#allocation2 + $0x4c] sm:$0xff]
    %v344 = vld [vmem:[#allocation2 + $0x54] sm:$0xff]
    %v345 = vld [vmem:[#allocation2 + $0x5c] sm:$0x3]
    %s346 = sld [smem:[#allocation4 + $0x6]]
    %v347 = vstv %s346
    %v348 = vmul.f32 %v340, %v347
    %v349 = vmul.f32 %v341, %v347
    %v350 = vmul.f32 %v342, %v347
    %v351 = vmul.f32 %v343, %v347
    %v352 = vmul.f32 %v344, %v347
    %v353 = vmul.f32 %v345, %v347
    %v354 = vadd.f32 %v334, %v348
    %v355 = vadd.f32 %v335, %v349
    %v356 = vadd.f32 %v336, %v350
    %v357 = vadd.f32 %v337, %v351
    %v358 = vadd.f32 %v338, %v352
    %v359 = vadd.f32 %v339, %v353
    %s360 = sld [smem:[#allocation4 + $0x7]]
    %v361 = vstv %s360
    %v362 = vmul.f32 %v340, %v361
    %v363 = vmul.f32 %v341, %v361
    %v364 = vmul.f32 %v342, %v361
    %v365 = vmul.f32 %v343, %v361
    %v366 = vmul.f32 %v344, %v361
    %v367 = vmul.f32 %v345, %v361
    %374 = vrot.lane.b32.xlu0 %v362, 126
    %v375 = vpop.permute.xlu0 %374
    %376 = vrot.lane.b32.xlu0 %v363, 126
    %v377 = vpop.permute.xlu0 %376
    %378 = vrot.lane.b32.xlu0 %v364, 126
    %v379 = vpop.permute.xlu0 %378
    %380 = vrot.lane.b32.xlu0 %v365, 126
    %v381 = vpop.permute.xlu0 %380
    %382 = vrot.lane.b32.xlu0 %v366, 126
    %v383 = vpop.permute.xlu0 %382
    %384 = vrot.lane.b32.xlu0 %v367, 126
    %v385 = vpop.permute.xlu0 %384
    %v392 = vadd.f32 %v354, %v375
    %v393 = vadd.f32 %v355, %v377
    %v394 = vadd.f32 %v356, %v379
    %v395 = vadd.f32 %v357, %v381
    %v396 = vadd.f32 %v358, %v383
    %v397 = vadd.f32 %v359, %v385
    %s398 = sld [smem:[#allocation4 + $0x8]]
    %v399 = vstv %s398
    %v400 = vmul.f32 %v340, %v399
    %v401 = vmul.f32 %v341, %v399
    %v402 = vmul.f32 %v342, %v399
    %v403 = vmul.f32 %v343, %v399
    %v404 = vmul.f32 %v344, %v399
    %v405 = vmul.f32 %v345, %v399
    %412 = vrot.lane.b32.xlu0 %v400, 124
    %v413 = vpop.permute.xlu0 %412
    %414 = vrot.lane.b32.xlu0 %v401, 124
    %v415 = vpop.permute.xlu0 %414
    %416 = vrot.lane.b32.xlu0 %v402, 124
    %v417 = vpop.permute.xlu0 %416
    %418 = vrot.lane.b32.xlu0 %v403, 124
    %v419 = vpop.permute.xlu0 %418
    %420 = vrot.lane.b32.xlu0 %v404, 124
    %v421 = vpop.permute.xlu0 %420
    %422 = vrot.lane.b32.xlu0 %v405, 124
    %v423 = vpop.permute.xlu0 %422
    %v430 = vadd.f32 %v392, %v413
    %v431 = vadd.f32 %v393, %v415
    %v432 = vadd.f32 %v394, %v417
    %v433 = vadd.f32 %v395, %v419
    %v434 = vadd.f32 %v396, %v421
    %v435 = vadd.f32 %v397, %v423
    %v436 = vld [vmem:[%s86] sm:$0xff]
    %v437 = vld [vmem:[%s86 + $0x8] sm:$0xff]
    %v438 = vld [vmem:[%s86 + $0x10] sm:$0x3]
    %v439 = vld [vmem:[%s86 + $0x48] sm:$0xff]
    %v440 = vld [vmem:[%s86 + $0x50] sm:$0xff]
    %v441 = vld [vmem:[%s86 + $0x58] sm:$0x3]
    %s442 = sld [smem:[#allocation4 + $0x9]]
    %v443 = vstv %s442
    %v444 = vmul.f32 %v436, %v443
    %v445 = vmul.f32 %v437, %v443
    %v446 = vmul.f32 %v438, %v443
    %v447 = vmul.f32 %v439, %v443
    %v448 = vmul.f32 %v440, %v443
    %v449 = vmul.f32 %v441, %v443
    %v450 = vadd.f32 %v430, %v444
    %v451 = vadd.f32 %v431, %v445
    %v452 = vadd.f32 %v432, %v446
    %v453 = vadd.f32 %v433, %v447
    %v454 = vadd.f32 %v434, %v448
    %v455 = vadd.f32 %v435, %v449
    %s456 = sld [smem:[#allocation4 + $0xa]]
    %v457 = vstv %s456
    %v458 = vmul.f32 %v436, %v457
    %v459 = vmul.f32 %v437, %v457
    %v460 = vmul.f32 %v438, %v457
    %v461 = vmul.f32 %v439, %v457
    %v462 = vmul.f32 %v440, %v457
    %v463 = vmul.f32 %v441, %v457
    %470 = vrot.lane.b32.xlu0 %v458, 126
    %v471 = vpop.permute.xlu0 %470
    %472 = vrot.lane.b32.xlu0 %v459, 126
    %v473 = vpop.permute.xlu0 %472
    %474 = vrot.lane.b32.xlu0 %v460, 126
    %v475 = vpop.permute.xlu0 %474
    %476 = vrot.lane.b32.xlu0 %v461, 126
    %v477 = vpop.permute.xlu0 %476
    %478 = vrot.lane.b32.xlu0 %v462, 126
    %v479 = vpop.permute.xlu0 %478
    %480 = vrot.lane.b32.xlu0 %v463, 126
    %v481 = vpop.permute.xlu0 %480
    %v488 = vadd.f32 %v450, %v471
    %v489 = vadd.f32 %v451, %v473
    %v490 = vadd.f32 %v452, %v475
    %v491 = vadd.f32 %v453, %v477
    %v492 = vadd.f32 %v454, %v479
    %v493 = vadd.f32 %v455, %v481
    %s494 = sld [smem:[#allocation4 + $0xb]]
    %v495 = vstv %s494
    %v496 = vmul.f32 %v436, %v495
    %v497 = vmul.f32 %v437, %v495
    %v498 = vmul.f32 %v438, %v495
    %v499 = vmul.f32 %v439, %v495
    %v500 = vmul.f32 %v440, %v495
    %v501 = vmul.f32 %v441, %v495
    %508 = vrot.lane.b32.xlu0 %v496, 124
    %v509 = vpop.permute.xlu0 %508
    %510 = vrot.lane.b32.xlu0 %v497, 124
    %v511 = vpop.permute.xlu0 %510
    %512 = vrot.lane.b32.xlu0 %v498, 124
    %v513 = vpop.permute.xlu0 %512
    %514 = vrot.lane.b32.xlu0 %v499, 124
    %v515 = vpop.permute.xlu0 %514
    %516 = vrot.lane.b32.xlu0 %v500, 124
    %v517 = vpop.permute.xlu0 %516
    %518 = vrot.lane.b32.xlu0 %v501, 124
    %v519 = vpop.permute.xlu0 %518
    %v526 = vadd.f32 %v488, %v509
    %v527 = vadd.f32 %v489, %v511
    %v528 = vadd.f32 %v490, %v513
    %v529 = vadd.f32 %v491, %v515
    %v530 = vadd.f32 %v492, %v517
    %v531 = vadd.f32 %v493, %v519
    %v532 = vld [vmem:[%s86 + $0x2] sm:$0xff]
    %v533 = vld [vmem:[%s86 + $0xa] sm:$0xff]
    %v534 = vld [vmem:[%s86 + $0x12] sm:$0x3]
    %v535 = vld [vmem:[%s86 + $0x4a] sm:$0xff]
    %v536 = vld [vmem:[%s86 + $0x52] sm:$0xff]
    %v537 = vld [vmem:[%s86 + $0x5a] sm:$0x3]
    %s538 = sld [smem:[#allocation4 + $0xc]]
    %v539 = vstv %s538
    %v540 = vmul.f32 %v532, %v539
    %v541 = vmul.f32 %v533, %v539
    %v542 = vmul.f32 %v534, %v539
    %v543 = vmul.f32 %v535, %v539
    %v544 = vmul.f32 %v536, %v539
    %v545 = vmul.f32 %v537, %v539
    %v546 = vadd.f32 %v526, %v540
    %v547 = vadd.f32 %v527, %v541
    %v548 = vadd.f32 %v528, %v542
    %v549 = vadd.f32 %v529, %v543
    %v550 = vadd.f32 %v530, %v544
    %v551 = vadd.f32 %v531, %v545
    %s552 = sld [smem:[#allocation4 + $0xd]]
    %v553 = vstv %s552
    %v554 = vmul.f32 %v532, %v553
    %v555 = vmul.f32 %v533, %v553
    %v556 = vmul.f32 %v534, %v553
    %v557 = vmul.f32 %v535, %v553
    %v558 = vmul.f32 %v536, %v553
    %v559 = vmul.f32 %v537, %v553
    %566 = vrot.lane.b32.xlu0 %v554, 126
    %v567 = vpop.permute.xlu0 %566
    %568 = vrot.lane.b32.xlu0 %v555, 126
    %v569 = vpop.permute.xlu0 %568
    %570 = vrot.lane.b32.xlu0 %v556, 126
    %v571 = vpop.permute.xlu0 %570
    %572 = vrot.lane.b32.xlu0 %v557, 126
    %v573 = vpop.permute.xlu0 %572
    %574 = vrot.lane.b32.xlu0 %v558, 126
    %v575 = vpop.permute.xlu0 %574
    %576 = vrot.lane.b32.xlu0 %v559, 126
    %v577 = vpop.permute.xlu0 %576
    %v584 = vadd.f32 %v546, %v567
    %v585 = vadd.f32 %v547, %v569
    %v586 = vadd.f32 %v548, %v571
    %v587 = vadd.f32 %v549, %v573
    %v588 = vadd.f32 %v550, %v575
    %v589 = vadd.f32 %v551, %v577
    %s590 = sld [smem:[#allocation4 + $0xe]]
    %v591 = vstv %s590
    %v592 = vmul.f32 %v532, %v591
    %v593 = vmul.f32 %v533, %v591
    %v594 = vmul.f32 %v534, %v591
    %v595 = vmul.f32 %v535, %v591
    %v596 = vmul.f32 %v536, %v591
    %v597 = vmul.f32 %v537, %v591
    %604 = vrot.lane.b32.xlu0 %v592, 124
    %v605 = vpop.permute.xlu0 %604
    %606 = vrot.lane.b32.xlu0 %v593, 124
    %v607 = vpop.permute.xlu0 %606
    %608 = vrot.lane.b32.xlu0 %v594, 124
    %v609 = vpop.permute.xlu0 %608
    %610 = vrot.lane.b32.xlu0 %v595, 124
    %v611 = vpop.permute.xlu0 %610
    %612 = vrot.lane.b32.xlu0 %v596, 124
    %v613 = vpop.permute.xlu0 %612
    %614 = vrot.lane.b32.xlu0 %v597, 124
    %v615 = vpop.permute.xlu0 %614
    %v622 = vadd.f32 %v584, %v605
    %v623 = vadd.f32 %v585, %v607
    %v624 = vadd.f32 %v586, %v609
    %v625 = vadd.f32 %v587, %v611
    %v626 = vadd.f32 %v588, %v613
    %v627 = vadd.f32 %v589, %v615
    %v628 = vld [vmem:[%s86 + $0x4] sm:$0xff]
    %v629 = vld [vmem:[%s86 + $0xc] sm:$0xff]
    %v630 = vld [vmem:[%s86 + $0x14] sm:$0x3]
    %v631 = vld [vmem:[%s86 + $0x4c] sm:$0xff]
    %v632 = vld [vmem:[%s86 + $0x54] sm:$0xff]
    %v633 = vld [vmem:[%s86 + $0x5c] sm:$0x3]
    %s634 = sld [smem:[#allocation4 + $0xf]]
    %v635 = vstv %s634
    %v636 = vmul.f32 %v628, %v635
    %v637 = vmul.f32 %v629, %v635
    %v638 = vmul.f32 %v630, %v635
    %v639 = vmul.f32 %v631, %v635
    %v640 = vmul.f32 %v632, %v635
    %v641 = vmul.f32 %v633, %v635
    %v642 = vadd.f32 %v622, %v636
    %v643 = vadd.f32 %v623, %v637
    %v644 = vadd.f32 %v624, %v638
    %v645 = vadd.f32 %v625, %v639
    %v646 = vadd.f32 %v626, %v640
    %v647 = vadd.f32 %v627, %v641
    %s648 = sld [smem:[#allocation4 + $0x10]]
    %v649 = vstv %s648
    %v650 = vmul.f32 %v628, %v649
    %v651 = vmul.f32 %v629, %v649
    %v652 = vmul.f32 %v630, %v649
    %v653 = vmul.f32 %v631, %v649
    %v654 = vmul.f32 %v632, %v649
    %v655 = vmul.f32 %v633, %v649
    %662 = vrot.lane.b32.xlu0 %v650, 126
    %v663 = vpop.permute.xlu0 %662
    %664 = vrot.lane.b32.xlu0 %v651, 126
    %v665 = vpop.permute.xlu0 %664
    %666 = vrot.lane.b32.xlu0 %v652, 126
    %v667 = vpop.permute.xlu0 %666
    %668 = vrot.lane.b32.xlu0 %v653, 126
    %v669 = vpop.permute.xlu0 %668
    %670 = vrot.lane.b32.xlu0 %v654, 126
    %v671 = vpop.permute.xlu0 %670
    %672 = vrot.lane.b32.xlu0 %v655, 126
    %v673 = vpop.permute.xlu0 %672
    %v680 = vadd.f32 %v642, %v663
    %v681 = vadd.f32 %v643, %v665
    %v682 = vadd.f32 %v644, %v667
    %v683 = vadd.f32 %v645, %v669
    %v684 = vadd.f32 %v646, %v671
    %v685 = vadd.f32 %v647, %v673
    %s686 = sld [smem:[#allocation4 + $0x11]]
    %v687 = vstv %s686
    %v688 = vmul.f32 %v628, %v687
    %v689 = vmul.f32 %v629, %v687
    %v690 = vmul.f32 %v630, %v687
    %v691 = vmul.f32 %v631, %v687
    %v692 = vmul.f32 %v632, %v687
    %v693 = vmul.f32 %v633, %v687
    %700 = vrot.lane.b32.xlu0 %v688, 124
    %v701 = vpop.permute.xlu0 %700
    %702 = vrot.lane.b32.xlu0 %v689, 124
    %v703 = vpop.permute.xlu0 %702
    %704 = vrot.lane.b32.xlu0 %v690, 124
    %v705 = vpop.permute.xlu0 %704
    %706 = vrot.lane.b32.xlu0 %v691, 124
    %v707 = vpop.permute.xlu0 %706
    %708 = vrot.lane.b32.xlu0 %v692, 124
    %v709 = vpop.permute.xlu0 %708
    %710 = vrot.lane.b32.xlu0 %v693, 124
    %v711 = vpop.permute.xlu0 %710
    %v718 = vadd.f32 %v680, %v701
    %v719 = vadd.f32 %v681, %v703
    %v720 = vadd.f32 %v682, %v705
    %v721 = vadd.f32 %v683, %v707
    %v722 = vadd.f32 %v684, %v709
    %v723 = vadd.f32 %v685, %v711
    %v724 = vld [vmem:[%s100] sm:$0xff]
    %v725 = vld [vmem:[%s100 + $0x8] sm:$0xff]
    %v726 = vld [vmem:[%s100 + $0x10] sm:$0x3]
    %v727 = vld [vmem:[%s100 + $0x48] sm:$0xff]
    %v728 = vld [vmem:[%s100 + $0x50] sm:$0xff]
    %v729 = vld [vmem:[%s100 + $0x58] sm:$0x3]
    %s730 = sld [smem:[#allocation4 + $0x12]]
    %v731 = vstv %s730
    %v732 = vmul.f32 %v724, %v731
    %v733 = vmul.f32 %v725, %v731
    %v734 = vmul.f32 %v726, %v731
    %v735 = vmul.f32 %v727, %v731
    %v736 = vmul.f32 %v728, %v731
    %v737 = vmul.f32 %v729, %v731
    %v738 = vadd.f32 %v718, %v732
    %v739 = vadd.f32 %v719, %v733
    %v740 = vadd.f32 %v720, %v734
    %v741 = vadd.f32 %v721, %v735
    %v742 = vadd.f32 %v722, %v736
    %v743 = vadd.f32 %v723, %v737
    %s744 = sld [smem:[#allocation4 + $0x13]]
    %v745 = vstv %s744
    %v746 = vmul.f32 %v724, %v745
    %v747 = vmul.f32 %v725, %v745
    %v748 = vmul.f32 %v726, %v745
    %v749 = vmul.f32 %v727, %v745
    %v750 = vmul.f32 %v728, %v745
    %v751 = vmul.f32 %v729, %v745
    %758 = vrot.lane.b32.xlu0 %v746, 126
    %v759 = vpop.permute.xlu0 %758
    %760 = vrot.lane.b32.xlu0 %v747, 126
    %v761 = vpop.permute.xlu0 %760
    %762 = vrot.lane.b32.xlu0 %v748, 126
    %v763 = vpop.permute.xlu0 %762
    %764 = vrot.lane.b32.xlu0 %v749, 126
    %v765 = vpop.permute.xlu0 %764
    %766 = vrot.lane.b32.xlu0 %v750, 126
    %v767 = vpop.permute.xlu0 %766
    %768 = vrot.lane.b32.xlu0 %v751, 126
    %v769 = vpop.permute.xlu0 %768
    %v776 = vadd.f32 %v738, %v759
    %v777 = vadd.f32 %v739, %v761
    %v778 = vadd.f32 %v740, %v763
    %v779 = vadd.f32 %v741, %v765
    %v780 = vadd.f32 %v742, %v767
    %v781 = vadd.f32 %v743, %v769
    %s782 = sld [smem:[#allocation4 + $0x14]]
    %v783 = vstv %s782
    %v784 = vmul.f32 %v724, %v783
    %v785 = vmul.f32 %v725, %v783
    %v786 = vmul.f32 %v726, %v783
    %v787 = vmul.f32 %v727, %v783
    %v788 = vmul.f32 %v728, %v783
    %v789 = vmul.f32 %v729, %v783
    %796 = vrot.lane.b32.xlu0 %v784, 124
    %v797 = vpop.permute.xlu0 %796
    %798 = vrot.lane.b32.xlu0 %v785, 124
    %v799 = vpop.permute.xlu0 %798
    %800 = vrot.lane.b32.xlu0 %v786, 124
    %v801 = vpop.permute.xlu0 %800
    %802 = vrot.lane.b32.xlu0 %v787, 124
    %v803 = vpop.permute.xlu0 %802
    %804 = vrot.lane.b32.xlu0 %v788, 124
    %v805 = vpop.permute.xlu0 %804
    %806 = vrot.lane.b32.xlu0 %v789, 124
    %v807 = vpop.permute.xlu0 %806
    %v814 = vadd.f32 %v776, %v797
    %v815 = vadd.f32 %v777, %v799
    %v816 = vadd.f32 %v778, %v801
    %v817 = vadd.f32 %v779, %v803
    %v818 = vadd.f32 %v780, %v805
    %v819 = vadd.f32 %v781, %v807
    %v820 = vld [vmem:[%s100 + $0x2] sm:$0xff]
    %v821 = vld [vmem:[%s100 + $0xa] sm:$0xff]
    %v822 = vld [vmem:[%s100 + $0x12] sm:$0x3]
    %v823 = vld [vmem:[%s100 + $0x4a] sm:$0xff]
    %v824 = vld [vmem:[%s100 + $0x52] sm:$0xff]
    %v825 = vld [vmem:[%s100 + $0x5a] sm:$0x3]
    %s826 = sld [smem:[#allocation4 + $0x15]]
    %v827 = vstv %s826
    %v828 = vmul.f32 %v820, %v827
    %v829 = vmul.f32 %v821, %v827
    %v830 = vmul.f32 %v822, %v827
    %v831 = vmul.f32 %v823, %v827
    %v832 = vmul.f32 %v824, %v827
    %v833 = vmul.f32 %v825, %v827
    %v834 = vadd.f32 %v814, %v828
    %v835 = vadd.f32 %v815, %v829
    %v836 = vadd.f32 %v816, %v830
    %v837 = vadd.f32 %v817, %v831
    %v838 = vadd.f32 %v818, %v832
    %v839 = vadd.f32 %v819, %v833
    %s840 = sld [smem:[#allocation4 + $0x16]]
    %v841 = vstv %s840
    %v842 = vmul.f32 %v820, %v841
    %v843 = vmul.f32 %v821, %v841
    %v844 = vmul.f32 %v822, %v841
    %v845 = vmul.f32 %v823, %v841
    %v846 = vmul.f32 %v824, %v841
    %v847 = vmul.f32 %v825, %v841
    %854 = vrot.lane.b32.xlu0 %v842, 126
    %v855 = vpop.permute.xlu0 %854
    %856 = vrot.lane.b32.xlu0 %v843, 126
    %v857 = vpop.permute.xlu0 %856
    %858 = vrot.lane.b32.xlu0 %v844, 126
    %v859 = vpop.permute.xlu0 %858
    %860 = vrot.lane.b32.xlu0 %v845, 126
    %v861 = vpop.permute.xlu0 %860
    %862 = vrot.lane.b32.xlu0 %v846, 126
    %v863 = vpop.permute.xlu0 %862
    %864 = vrot.lane.b32.xlu0 %v847, 126
    %v865 = vpop.permute.xlu0 %864
    %v872 = vadd.f32 %v834, %v855
    %v873 = vadd.f32 %v835, %v857
    %v874 = vadd.f32 %v836, %v859
    %v875 = vadd.f32 %v837, %v861
    %v876 = vadd.f32 %v838, %v863
    %v877 = vadd.f32 %v839, %v865
    %s878 = sld [smem:[#allocation4 + $0x17]]
    %v879 = vstv %s878
    %v880 = vmul.f32 %v820, %v879
    %v881 = vmul.f32 %v821, %v879
    %v882 = vmul.f32 %v822, %v879
    %v883 = vmul.f32 %v823, %v879
    %v884 = vmul.f32 %v824, %v879
    %v885 = vmul.f32 %v825, %v879
    %892 = vrot.lane.b32.xlu0 %v880, 124
    %v893 = vpop.permute.xlu0 %892
    %894 = vrot.lane.b32.xlu0 %v881, 124
    %v895 = vpop.permute.xlu0 %894
    %896 = vrot.lane.b32.xlu0 %v882, 124
    %v897 = vpop.permute.xlu0 %896
    %898 = vrot.lane.b32.xlu0 %v883, 124
    %v899 = vpop.permute.xlu0 %898
    %900 = vrot.lane.b32.xlu0 %v884, 124
    %v901 = vpop.permute.xlu0 %900
    %902 = vrot.lane.b32.xlu0 %v885, 124
    %v903 = vpop.permute.xlu0 %902
    %v910 = vadd.f32 %v872, %v893
    %v911 = vadd.f32 %v873, %v895
    %v912 = vadd.f32 %v874, %v897
    %v913 = vadd.f32 %v875, %v899
    %v914 = vadd.f32 %v876, %v901
    %v915 = vadd.f32 %v877, %v903
    %v916 = vld [vmem:[%s100 + $0x4] sm:$0xff]
    %v917 = vld [vmem:[%s100 + $0xc] sm:$0xff]
    %v918 = vld [vmem:[%s100 + $0x14] sm:$0x3]
    %v919 = vld [vmem:[%s100 + $0x4c] sm:$0xff]
    %v920 = vld [vmem:[%s100 + $0x54] sm:$0xff]
    %v921 = vld [vmem:[%s100 + $0x5c] sm:$0x3]
    %s922 = sld [smem:[#allocation4 + $0x18]]
    %v923 = vstv %s922
    %v924 = vmul.f32 %v916, %v923
    %v925 = vmul.f32 %v917, %v923
    %v926 = vmul.f32 %v918, %v923
    %v927 = vmul.f32 %v919, %v923
    %v928 = vmul.f32 %v920, %v923
    %v929 = vmul.f32 %v921, %v923
    %v930 = vadd.f32 %v910, %v924
    %v931 = vadd.f32 %v911, %v925
    %v932 = vadd.f32 %v912, %v926
    %v933 = vadd.f32 %v913, %v927
    %v934 = vadd.f32 %v914, %v928
    %v935 = vadd.f32 %v915, %v929
    %s936 = sld [smem:[#allocation4 + $0x19]]
    %v937 = vstv %s936
    %v938 = vmul.f32 %v916, %v937
    %v939 = vmul.f32 %v917, %v937
    %v940 = vmul.f32 %v918, %v937
    %v941 = vmul.f32 %v919, %v937
    %v942 = vmul.f32 %v920, %v937
    %v943 = vmul.f32 %v921, %v937
    %950 = vrot.lane.b32.xlu0 %v938, 126
    %v951 = vpop.permute.xlu0 %950
    %952 = vrot.lane.b32.xlu0 %v939, 126
    %v953 = vpop.permute.xlu0 %952
    %954 = vrot.lane.b32.xlu0 %v940, 126
    %v955 = vpop.permute.xlu0 %954
    %956 = vrot.lane.b32.xlu0 %v941, 126
    %v957 = vpop.permute.xlu0 %956
    %958 = vrot.lane.b32.xlu0 %v942, 126
    %v959 = vpop.permute.xlu0 %958
    %960 = vrot.lane.b32.xlu0 %v943, 126
    %v961 = vpop.permute.xlu0 %960
    %v968 = vadd.f32 %v930, %v951
    %v969 = vadd.f32 %v931, %v953
    %v970 = vadd.f32 %v932, %v955
    %v971 = vadd.f32 %v933, %v957
    %v972 = vadd.f32 %v934, %v959
    %v973 = vadd.f32 %v935, %v961
    %s974 = sld [smem:[#allocation4 + $0x1a]]
    %v975 = vstv %s974
    %v976 = vmul.f32 %v916, %v975
    %v977 = vmul.f32 %v917, %v975
    %v978 = vmul.f32 %v918, %v975
    %v979 = vmul.f32 %v919, %v975
    %v980 = vmul.f32 %v920, %v975
    %v981 = vmul.f32 %v921, %v975
    %988 = vrot.lane.b32.xlu0 %v976, 124
    %v989 = vpop.permute.xlu0 %988
    %990 = vrot.lane.b32.xlu0 %v977, 124
    %v991 = vpop.permute.xlu0 %990
    %992 = vrot.lane.b32.xlu0 %v978, 124
    %v993 = vpop.permute.xlu0 %992
    %994 = vrot.lane.b32.xlu0 %v979, 124
    %v995 = vpop.permute.xlu0 %994
    %996 = vrot.lane.b32.xlu0 %v980, 124
    %v997 = vpop.permute.xlu0 %996
    %998 = vrot.lane.b32.xlu0 %v981, 124
    %v999 = vpop.permute.xlu0 %998
    %v1006 = vadd.f32 %v968, %v989
    %v1007 = vadd.f32 %v969, %v991
    %v1008 = vadd.f32 %v970, %v993
    %v1009 = vadd.f32 %v971, %v995
    %v1010 = vadd.f32 %v972, %v997
    %v1011 = vadd.f32 %v973, %v999
    %vm1018 = vcmask 1040384
    %v1019 = vrot.slane %v1006, 7
    %v1020 = vrot.slane %v1007, 7
    %v1021 = vsel %vm1018, %v1019, %v1020
    %v1022 = vrot.slane %v1008, 7
    %v1023 = vsel %vm1018, %v1020, %v1022
    %v1024 = vrot.slane %v1009, 7
    %v1025 = vrot.slane %v1010, 7
    %v1026 = vsel %vm1018, %v1024, %v1025
    %v1027 = vrot.slane %v1011, 7
    %v1028 = vsel %vm1018, %v1025, %v1027
    %v1035 = vsel %vm1018, %v1006, %v1019
    %v1036 = vsel %vm1018, %v1009, %v1024
    %vm1037 = vcmask 1046528
    %v1038 = vrot.slane %v1006, 1
    %v1039 = vrot.slane %v1007, 1
    %v1040 = vsel %vm1037, %v1038, %v1039
    %v1041 = vrot.slane %v1008, 1
    %v1042 = vsel %vm1037, %v1039, %v1041
    %v1043 = vrot.slane %v1009, 1
    %v1044 = vrot.slane %v1010, 1
    %v1045 = vsel %vm1037, %v1043, %v1044
    %v1046 = vrot.slane %v1011, 1
    %v1047 = vsel %vm1037, %v1044, %v1046
    %v1054 = vsel %vm1018, %v1041, %v1008
    %v1055 = vsel %vm1018, %v1046, %v1011
    %v1056 = vmax.f32 %v1006, %v1035
    %v1057 = vmax.f32 %v1007, %v1021
    %v1058 = vmax.f32 %v1008, %v1023
    %v1059 = vmax.f32 %v1009, %v1036
    %v1060 = vmax.f32 %v1010, %v1026
    %v1061 = vmax.f32 %v1011, %v1028
    %v1062 = vmax.f32 %v1056, %v1040
    %v1063 = vmax.f32 %v1057, %v1042
    %v1064 = vmax.f32 %v1058, %v1054
    %v1065 = vmax.f32 %v1059, %v1045
    %v1066 = vmax.f32 %v1060, %v1047
    %v1067 = vmax.f32 %v1061, %v1055
    %1074 = vrot.lane.b32.xlu0 %v1062, 1
    %v1075 = vpop.permute.xlu0 %1074
    %1076 = vrot.lane.b32.xlu0 %v1063, 1
    %v1077 = vpop.permute.xlu0 %1076
    %1078 = vrot.lane.b32.xlu0 %v1064, 1
    %v1079 = vpop.permute.xlu0 %1078
    %1080 = vrot.lane.b32.xlu0 %v1065, 1
    %v1081 = vpop.permute.xlu0 %1080
    %1082 = vrot.lane.b32.xlu0 %v1066, 1
    %v1083 = vpop.permute.xlu0 %1082
    %1084 = vrot.lane.b32.xlu0 %v1067, 1
    %v1085 = vpop.permute.xlu0 %1084
    %vm1092 = vcmask 7168
    %v1093 = vsel %vm1092, %v1062, %v1075
    %v1094 = vsel %vm1092, %v1063, %v1077
    %v1095 = vsel %vm1092, %v1064, %v1079
    %v1096 = vsel %vm1092, %v1065, %v1081
    %v1097 = vsel %vm1092, %v1066, %v1083
    %v1098 = vsel %vm1092, %v1067, %v1085
    %1099 = vrot.lane.b32.xlu0 %v1062, 127
    %v1100 = vpop.permute.xlu0 %1099
    %1101 = vrot.lane.b32.xlu0 %v1063, 127
    %v1102 = vpop.permute.xlu0 %1101
    %1103 = vrot.lane.b32.xlu0 %v1064, 127
    %v1104 = vpop.permute.xlu0 %1103
    %1105 = vrot.lane.b32.xlu0 %v1065, 127
    %v1106 = vpop.permute.xlu0 %1105
    %1107 = vrot.lane.b32.xlu0 %v1066, 127
    %v1108 = vpop.permute.xlu0 %1107
    %1109 = vrot.lane.b32.xlu0 %v1067, 127
    %v1110 = vpop.permute.xlu0 %1109
    %vm1117 = vcmask 138240
    %v1118 = vsel %vm1117, %v1100, %v1062
    %v1119 = vsel %vm1117, %v1102, %v1063
    %v1120 = vsel %vm1117, %v1104, %v1064
    %v1121 = vsel %vm1117, %v1106, %v1065
    %v1122 = vsel %vm1117, %v1108, %v1066
    %v1123 = vsel %vm1117, %v1110, %v1067
    %v1124 = vmax.f32 %v1062, %v1093
    %v1125 = vmax.f32 %v1063, %v1094
    %v1126 = vmax.f32 %v1064, %v1095
    %v1127 = vmax.f32 %v1065, %v1096
    %v1128 = vmax.f32 %v1066, %v1097
    %v1129 = vmax.f32 %v1067, %v1098
    %v1130 = vmax.f32 %v1124, %v1118
    %v1131 = vmax.f32 %v1125, %v1119
    %v1132 = vmax.f32 %v1126, %v1120
    %v1133 = vmax.f32 %v1127, %v1121
    %v1134 = vmax.f32 %v1128, %v1122
    %v1135 = vmax.f32 %v1129, %v1123
    %v1136 = vlaneseq
    %v1137 = vshrl.u32 %v1136, 7
    %v1138 = vadd.s32 %v1137, 8
    %v1139 = vlaneseq
    %v1140 = vand.u32 %v1139, 127
    %v1141 = vmul.u32 %v1137, 2
    %v1142 = vmul.u32 %v1138, 2
    %vm1143 = vcmp.eq.s32.totalorder %v1140, %v1141
    %vm1144 = vcmp.eq.s32.totalorder %v1140, %v1142
    %v1145 = vsel %vm1143, 1, 0
    %v1146 = vsel %vm1144, 1, 0
    %v1147 = vcvt.s32.f32 %v1145
    %v1148 = vcvt.s32.f32 %v1146
    %v1149 = vadd.s32 %v1137, 16
    %v1150 = vmul.u32 %v1140, 2
    %vm1151 = vcmp.eq.s32.totalorder %v1137, %v1150
    %vm1152 = vcmp.eq.s32.totalorder %v1138, %v1150
    %vm1153 = vcmp.eq.s32.totalorder %v1149, %v1150
    %v1154 = vsel %vm1151, 1, 0
    %v1155 = vsel %vm1152, 1, 0
    %v1156 = vsel %vm1153, 1, 0
    %v1157 = vcvt.s32.f32 %v1154
    %v1158 = vcvt.s32.f32 %v1155
    %v1159 = vcvt.s32.f32 %v1156
    %vm1160 = vcmask 146432
    %v1162 = vsel %vm1160, %v1147, 0
    %v1165 = vsel %vm1160, %v1148, 0
    %vm1167 = vcmask 1041408
    %v1169 = vsel %vm1167, %v1132, 0
    %1171 = vmatprep.subr.mxu0 0.0
    %1172 = vmatpush1.msra.mxu0 0.0
    %1173 = vmatprep.subr.mxu0 0.0
    %1174 = vmatpush1.msra.mxu0 0.0
    %1175 = vmatprep.subr.mxu0 0.0
    %1176 = vmatpush1.msra.mxu0 0.0
    %1177 = vmatprep.subr.mxu0 0.0
    %1178 = vmatpush1.msra.mxu0 0.0
    %1179 = vmatprep.subr.mxu0 0.0
    %1180 = vmatpush1.msra.mxu0 0.0
    %1181 = vmatprep.subr.mxu0 0.0
    %1182 = vmatpush1.msra.mxu0 0.0
    %1183 = vmatprep.subr.mxu0 0.0
    %1184 = vmatpush1.msra.mxu0 0.0
    %1185 = vmatprep.subr.mxu0 0.0
    %1186 = vmatpush1.msra.mxu0 0.0
    %1187 = vmatprep.subr.mxu0 0.0
    %1188 = vmatpush1.msra.mxu0 0.0
    %1189 = vmatprep.subr.mxu0 0.0
    %1190 = vmatpush1.msra.mxu0 0.0
    %1191 = vmatprep.subr.mxu0 0.0
    %1192 = vmatpush1.msra.mxu0 0.0
    %1193 = vmatprep.subr.mxu0 0.0
    %1194 = vmatpush1.msra.mxu0 0.0
    %1195 = vmatprep.subr.mxu0 0.0
    %1196 = vmatpush1.msra.mxu0 0.0
    %1197 = vmatprep.subr.mxu0 0.0
    %1198 = vmatpush1.msra.mxu0 %v1169
    %1199 = vmatprep.subr.mxu0 0.0
    %1200 = vmatpush1.msra.mxu0 %v1131
    %1201 = vmatprep.subr.mxu0 0.0
    %1202 = vmatpush1.msra.mxu0 %v1130
    %1203 = vmatprep.subr.mxu0 0.0
    %1204 = vmatpush2.msra.mxu0 0.0
    %1205 = vmatprep.subr.mxu0 0.0
    %1206 = vmatpush2.msra.mxu0 0.0
    %1207 = vmatprep.subr.mxu0 0.0
    %1208 = vmatpush2.msra.mxu0 0.0
    %1209 = vmatprep.subr.mxu0 0.0
    %1210 = vmatpush2.msra.mxu0 0.0
    %1211 = vmatprep.subr.mxu0 0.0
    %1212 = vmatpush2.msra.mxu0 0.0
    %1213 = vmatprep.subr.mxu0 0.0
    %1214 = vmatpush2.msra.mxu0 0.0
    %1215 = vmatprep.subr.mxu0 0.0
    %1216 = vmatpush2.msra.mxu0 0.0
    %1217 = vmatprep.subr.mxu0 0.0
    %1218 = vmatpush2.msra.mxu0 0.0
    %1219 = vmatprep.subr.mxu0 0.0
    %1220 = vmatpush2.msra.mxu0 0.0
    %1221 = vmatprep.subr.mxu0 0.0
    %1222 = vmatpush2.msra.mxu0 0.0
    %1223 = vmatprep.subr.mxu0 0.0
    %1224 = vmatpush2.msra.mxu0 0.0
    %1225 = vmatprep.subr.mxu0 0.0
    %1226 = vmatpush2.msra.mxu0 0.0
    %1227 = vmatprep.subr.mxu0 0.0
    %1228 = vmatpush2.msra.mxu0 0.0
    %1229 = vmatprep.subr.mxu0 0.0
    %1230 = vmatpush2.msra.mxu0 0.0
    %1231 = vmatprep.subr.mxu0 0.0
    %1232 = vmatpush2.msra.mxu0 0.0
    %1233 = vmatprep.subr.mxu0 0.0
    %1234 = vmatpush2.msra.mxu0 0.0
    %1235 = vmatprep.mubr.f32.mxu0 0.0
    %1236 = vmatmul.mubr.f32.gmra.mxu0 %v1162
    %v1237 = vpop.f32.mrf.mxu0
    %v1238 = vadd.f32 0.0, %v1237
    %v1239 = vpop.f32.mrf.mxu0
    %1240 = vmatprep.mubr.f32.mxu0 0.0
    %1241 = vmatmul.mubr.f32.gmra.mxu0 %v1165
    %v1242 = vpop.f32.mrf.mxu0
    %v1243 = vadd.f32 0.0, %v1242
    %v1244 = vpop.f32.mrf.mxu0
    %1245 = vdwg.mxu0
    %v1247 = vsel %vm1160, %v1238, 0
    %v1250 = vsel %vm1160, %v1243, 0
    %v1253 = vsel %vm1167, %v1159, 0
    %1255 = vmatprep.subr.mxu0 0.0
    %1256 = vmatpush1.msra.mxu0 0.0
    %1257 = vmatprep.subr.mxu0 0.0
    %1258 = vmatpush1.msra.mxu0 0.0
    %1259 = vmatprep.subr.mxu0 0.0
    %1260 = vmatpush1.msra.mxu0 0.0
    %1261 = vmatprep.subr.mxu0 0.0
    %1262 = vmatpush1.msra.mxu0 0.0
    %1263 = vmatprep.subr.mxu0 0.0
    %1264 = vmatpush1.msra.mxu0 0.0
    %1265 = vmatprep.subr.mxu0 0.0
    %1266 = vmatpush1.msra.mxu0 0.0
    %1267 = vmatprep.subr.mxu0 0.0
    %1268 = vmatpush1.msra.mxu0 0.0
    %1269 = vmatprep.subr.mxu0 0.0
    %1270 = vmatpush1.msra.mxu0 0.0
    %1271 = vmatprep.subr.mxu0 0.0
    %1272 = vmatpush1.msra.mxu0 0.0
    %1273 = vmatprep.subr.mxu0 0.0
    %1274 = vmatpush1.msra.mxu0 0.0
    %1275 = vmatprep.subr.mxu0 0.0
    %1276 = vmatpush1.msra.mxu0 0.0
    %1277 = vmatprep.subr.mxu0 0.0
    %1278 = vmatpush1.msra.mxu0 0.0
    %1279 = vmatprep.subr.mxu0 0.0
    %1280 = vmatpush1.msra.mxu0 0.0
    %1281 = vmatprep.subr.mxu0 0.0
    %1282 = vmatpush1.msra.mxu0 %v1253
    %1283 = vmatprep.subr.mxu0 0.0
    %1284 = vmatpush1.msra.mxu0 %v1158
    %1285 = vmatprep.subr.mxu0 0.0
    %1286 = vmatpush1.msra.mxu0 %v1157
    %1287 = vmatprep.subr.mxu0 0.0
    %1288 = vmatpush2.msra.mxu0 0.0
    %1289 = vmatprep.subr.mxu0 0.0
    %1290 = vmatpush2.msra.mxu0 0.0
    %1291 = vmatprep.subr.mxu0 0.0
    %1292 = vmatpush2.msra.mxu0 0.0
    %1293 = vmatprep.subr.mxu0 0.0
    %1294 = vmatpush2.msra.mxu0 0.0
    %1295 = vmatprep.subr.mxu0 0.0
    %1296 = vmatpush2.msra.mxu0 0.0
    %1297 = vmatprep.subr.mxu0 0.0
    %1298 = vmatpush2.msra.mxu0 0.0
    %1299 = vmatprep.subr.mxu0 0.0
    %1300 = vmatpush2.msra.mxu0 0.0
    %1301 = vmatprep.subr.mxu0 0.0
    %1302 = vmatpush2.msra.mxu0 0.0
    %1303 = vmatprep.subr.mxu0 0.0
    %1304 = vmatpush2.msra.mxu0 0.0
    %1305 = vmatprep.subr.mxu0 0.0
    %1306 = vmatpush2.msra.mxu0 0.0
    %1307 = vmatprep.subr.mxu0 0.0
    %1308 = vmatpush2.msra.mxu0 0.0
    %1309 = vmatprep.subr.mxu0 0.0
    %1310 = vmatpush2.msra.mxu0 0.0
    %1311 = vmatprep.subr.mxu0 0.0
    %1312 = vmatpush2.msra.mxu0 0.0
    %1313 = vmatprep.subr.mxu0 0.0
    %1314 = vmatpush2.msra.mxu0 0.0
    %1315 = vmatprep.subr.mxu0 0.0
    %1316 = vmatpush2.msra.mxu0 0.0
    %1317 = vmatprep.subr.mxu0 0.0
    %1318 = vmatpush2.msra.mxu0 0.0
    %1319 = vmatprep.mubr.f32.mxu0 0.0
    %1320 = vmatmul.mubr.f32.gmra.mxu0 %v1247
    %v1321 = vpop.f32.mrf.mxu0
    %v1322 = vadd.f32 0.0, %v1321
    %v1323 = vpop.f32.mrf.mxu0
    %1324 = vmatprep.mubr.f32.mxu0 0.0
    %1325 = vmatmul.mubr.f32.gmra.mxu0 %v1250
    %v1326 = vpop.f32.mrf.mxu0
    %v1327 = vadd.f32 0.0, %v1326
    %v1328 = vpop.f32.mrf.mxu0
    %1329 = vdwg.mxu0
    %v1330 = vmax.f32 %v1322, 0.0
    %v1331 = vmax.f32 %v1327, 0.0
    %v1332 = vmin.f32 %v1330, 6.0
    %v1333 = vmin.f32 %v1331, 6.0
    %vm1334 = vcmask 72704
    %1335 = vst.msk [vmem:[%s3] sm:$0xff] %vm1334, %v1332
    %vm1336 = vcmask 65536
    %1337 = vst.msk [vmem:[%s3 + $0x8] sm:$0x1] %vm1336, %v1333
    %v1339 = vsel %vm1167, %v1135, 0
    %1341 = vmatprep.subr.mxu0 0.0
    %1342 = vmatpush1.msra.mxu0 0.0
    %1343 = vmatprep.subr.mxu0 0.0
    %1344 = vmatpush1.msra.mxu0 0.0
    %1345 = vmatprep.subr.mxu0 0.0
    %1346 = vmatpush1.msra.mxu0 0.0
    %1347 = vmatprep.subr.mxu0 0.0
    %1348 = vmatpush1.msra.mxu0 0.0
    %1349 = vmatprep.subr.mxu0 0.0
    %1350 = vmatpush1.msra.mxu0 0.0
    %1351 = vmatprep.subr.mxu0 0.0
    %1352 = vmatpush1.msra.mxu0 0.0
    %1353 = vmatprep.subr.mxu0 0.0
    %1354 = vmatpush1.msra.mxu0 0.0
    %1355 = vmatprep.subr.mxu0 0.0
    %1356 = vmatpush1.msra.mxu0 0.0
    %1357 = vmatprep.subr.mxu0 0.0
    %1358 = vmatpush1.msra.mxu0 0.0
    %1359 = vmatprep.subr.mxu0 0.0
    %1360 = vmatpush1.msra.mxu0 0.0
    %1361 = vmatprep.subr.mxu0 0.0
    %1362 = vmatpush1.msra.mxu0 0.0
    %1363 = vmatprep.subr.mxu0 0.0
    %1364 = vmatpush1.msra.mxu0 0.0
    %1365 = vmatprep.subr.mxu0 0.0
    %1366 = vmatpush1.msra.mxu0 0.0
    %1367 = vmatprep.subr.mxu0 0.0
    %1368 = vmatpush1.msra.mxu0 %v1339
    %1369 = vmatprep.subr.mxu0 0.0
    %1370 = vmatpush1.msra.mxu0 %v1134
    %1371 = vmatprep.subr.mxu0 0.0
    %1372 = vmatpush1.msra.mxu0 %v1133
    %1373 = vmatprep.subr.mxu0 0.0
    %1374 = vmatpush2.msra.mxu0 0.0
    %1375 = vmatprep.subr.mxu0 0.0
    %1376 = vmatpush2.msra.mxu0 0.0
    %1377 = vmatprep.subr.mxu0 0.0
    %1378 = vmatpush2.msra.mxu0 0.0
    %1379 = vmatprep.subr.mxu0 0.0
    %1380 = vmatpush2.msra.mxu0 0.0
    %1381 = vmatprep.subr.mxu0 0.0
    %1382 = vmatpush2.msra.mxu0 0.0
    %1383 = vmatprep.subr.mxu0 0.0
    %1384 = vmatpush2.msra.mxu0 0.0
    %1385 = vmatprep.subr.mxu0 0.0
    %1386 = vmatpush2.msra.mxu0 0.0
    %1387 = vmatprep.subr.mxu0 0.0
    %1388 = vmatpush2.msra.mxu0 0.0
    %1389 = vmatprep.subr.mxu0 0.0
    %1390 = vmatpush2.msra.mxu0 0.0
    %1391 = vmatprep.subr.mxu0 0.0
    %1392 = vmatpush2.msra.mxu0 0.0
    %1393 = vmatprep.subr.mxu0 0.0
    %1394 = vmatpush2.msra.mxu0 0.0
    %1395 = vmatprep.subr.mxu0 0.0
    %1396 = vmatpush2.msra.mxu0 0.0
    %1397 = vmatprep.subr.mxu0 0.0
    %1398 = vmatpush2.msra.mxu0 0.0
    %1399 = vmatprep.subr.mxu0 0.0
    %1400 = vmatpush2.msra.mxu0 0.0
    %1401 = vmatprep.subr.mxu0 0.0
    %1402 = vmatpush2.msra.mxu0 0.0
    %1403 = vmatprep.subr.mxu0 0.0
    %1404 = vmatpush2.msra.mxu0 0.0
    %1405 = vmatprep.mubr.f32.mxu0 0.0
    %1406 = vmatmul.mubr.f32.gmra.mxu0 %v1162
    %v1407 = vpop.f32.mrf.mxu0
    %v1408 = vadd.f32 0.0, %v1407
    %v1409 = vpop.f32.mrf.mxu0
    %1410 = vmatprep.mubr.f32.mxu0 0.0
    %1411 = vmatmul.mubr.f32.gmra.mxu0 %v1165
    %v1412 = vpop.f32.mrf.mxu0
    %v1413 = vadd.f32 0.0, %v1412
    %v1414 = vpop.f32.mrf.mxu0
    %1415 = vdwg.mxu0
    %v1417 = vsel %vm1160, %v1408, 0
    %v1420 = vsel %vm1160, %v1413, 0
    %1422 = vmatprep.subr.mxu0 0.0
    %1423 = vmatpush1.msra.mxu0 0.0
    %1424 = vmatprep.subr.mxu0 0.0
    %1425 = vmatpush1.msra.mxu0 0.0
    %1426 = vmatprep.subr.mxu0 0.0
    %1427 = vmatpush1.msra.mxu0 0.0
    %1428 = vmatprep.subr.mxu0 0.0
    %1429 = vmatpush1.msra.mxu0 0.0
    %1430 = vmatprep.subr.mxu0 0.0
    %1431 = vmatpush1.msra.mxu0 0.0
    %1432 = vmatprep.subr.mxu0 0.0
    %1433 = vmatpush1.msra.mxu0 0.0
    %1434 = vmatprep.subr.mxu0 0.0
    %1435 = vmatpush1.msra.mxu0 0.0
    %1436 = vmatprep.subr.mxu0 0.0
    %1437 = vmatpush1.msra.mxu0 0.0
    %1438 = vmatprep.subr.mxu0 0.0
    %1439 = vmatpush1.msra.mxu0 0.0
    %1440 = vmatprep.subr.mxu0 0.0
    %1441 = vmatpush1.msra.mxu0 0.0
    %1442 = vmatprep.subr.mxu0 0.0
    %1443 = vmatpush1.msra.mxu0 0.0
    %1444 = vmatprep.subr.mxu0 0.0
    %1445 = vmatpush1.msra.mxu0 0.0
    %1446 = vmatprep.subr.mxu0 0.0
    %1447 = vmatpush1.msra.mxu0 0.0
    %1448 = vmatprep.subr.mxu0 0.0
    %1449 = vmatpush1.msra.mxu0 %v1253
    %1450 = vmatprep.subr.mxu0 0.0
    %1451 = vmatpush1.msra.mxu0 %v1158
    %1452 = vmatprep.subr.mxu0 0.0
    %1453 = vmatpush1.msra.mxu0 %v1157
    %1454 = vmatprep.subr.mxu0 0.0
    %1455 = vmatpush2.msra.mxu0 0.0
    %1456 = vmatprep.subr.mxu0 0.0
    %1457 = vmatpush2.msra.mxu0 0.0
    %1458 = vmatprep.subr.mxu0 0.0
    %1459 = vmatpush2.msra.mxu0 0.0
    %1460 = vmatprep.subr.mxu0 0.0
    %1461 = vmatpush2.msra.mxu0 0.0
    %1462 = vmatprep.subr.mxu0 0.0
    %1463 = vmatpush2.msra.mxu0 0.0
    %1464 = vmatprep.subr.mxu0 0.0
    %1465 = vmatpush2.msra.mxu0 0.0
    %1466 = vmatprep.subr.mxu0 0.0
    %1467 = vmatpush2.msra.mxu0 0.0
    %1468 = vmatprep.subr.mxu0 0.0
    %1469 = vmatpush2.msra.mxu0 0.0
    %1470 = vmatprep.subr.mxu0 0.0
    %1471 = vmatpush2.msra.mxu0 0.0
    %1472 = vmatprep.subr.mxu0 0.0
    %1473 = vmatpush2.msra.mxu0 0.0
    %1474 = vmatprep.subr.mxu0 0.0
    %1475 = vmatpush2.msra.mxu0 0.0
    %1476 = vmatprep.subr.mxu0 0.0
    %1477 = vmatpush2.msra.mxu0 0.0
    %1478 = vmatprep.subr.mxu0 0.0
    %1479 = vmatpush2.msra.mxu0 0.0
    %1480 = vmatprep.subr.mxu0 0.0
    %1481 = vmatpush2.msra.mxu0 0.0
    %1482 = vmatprep.subr.mxu0 0.0
    %1483 = vmatpush2.msra.mxu0 0.0
    %1484 = vmatprep.subr.mxu0 0.0
    %1485 = vmatpush2.msra.mxu0 0.0
    %1486 = vmatprep.mubr.f32.mxu0 0.0
    %1487 = vmatmul.mubr.f32.gmra.mxu0 %v1417
    %v1488 = vpop.f32.mrf.mxu0
    %v1489 = vadd.f32 0.0, %v1488
    %v1490 = vpop.f32.mrf.mxu0
    %1491 = vmatprep.mubr.f32.mxu0 0.0
    %1492 = vmatmul.mubr.f32.gmra.mxu0 %v1420
    %v1493 = vpop.f32.mrf.mxu0
    %v1494 = vadd.f32 0.0, %v1493
    %v1495 = vpop.f32.mrf.mxu0
    %1496 = vdwg.mxu0
    %v1497 = vmax.f32 %v1489, 0.0
    %v1498 = vmax.f32 %v1494, 0.0
    %v1499 = vmin.f32 %v1497, 6.0
    %v1500 = vmin.f32 %v1498, 6.0
    %s1501 = scalar_lea.vmem %s3, 16
    %1502 = vst.msk [vmem:[%s1501] sm:$0xff] %vm1334, %v1499
    %1503 = vst.msk [vmem:[%s1501 + $0x8] sm:$0x1] %vm1336, %v1500
    // Predicated region
    $region22: #{tpu_custom_call.1} parent=1 // pred_check
      _
    $region23: #{tpu_custom_call.1} parent=1 // pred_check_branch
      %1505 = sbr.rel (0) target = $region25
    $region24: #{tpu_custom_call.1} parent=1 // pred_region
      _
    $region25: #{tpu_custom_call.1} parent=1 // pred_fallthru
      _
    // Predicated region
    $region26: #{tpu_custom_call.1} parent=1 // pred_check
      _
    $region27: #{tpu_custom_call.1} parent=1 // pred_check_branch
      %1507 = sbr.rel (0) target = $region29
    $region28: #{tpu_custom_call.1} parent=1 // pred_region
      _
    $region29: #{tpu_custom_call.1} parent=1 // pred_fallthru
      _
    %1508 = vsyncpa [#allocation5], 1
    %1509 = vsyncpa [#allocation6], 1

</llo_original>
